<compile_context>
chip_gen: v5e
topology: v5e:2x2
jax: 0.10.0
libtpu: 0.0.40
codegen_flags: <defaults>
</compile_context>

<pallas_src>
import functools

import jax
import jax.numpy as jnp
import numpy as np
from jax.experimental import pallas as pl
from jax.experimental.pallas import tpu as pltpu


_WPAD = 8  # sublane-aligned column-halo width of the depthwise staging scratch


# ----------------------------------------------------------------------------
# Fused Pallas kernel: expand 1x1 (+shortcut 1x1) -> depthwise 3x3 -> project
# ----------------------------------------------------------------------------

def _block_kernel(x_ref, wcat_ref, wdw_ref, w3_ref, sbm_ref, sbo_ref,
                  out_ref, xp_scr, t2_scr, *,
                  stride, H, W, Hout, Wout, Cout, has_shortcut):
    f32 = jnp.float32
    Cin = x_ref.shape[-1]
    Cm = wdw_ref.shape[-1]                 # lane-padded mid channels

    # ---- re-zero only the halo ring of the staging scratch ------------------
    # The interior is fully overwritten below every step.  Doing this per step
    # (instead of once under program_id==0) stays correct when the batch grid
    # is sharded across TensorCores, and is far cheaper than zeroing the whole
    # scratch at real MobileNet resolutions.
    xp_scr[:, 0:_WPAD, :] = jnp.zeros((H + 2, _WPAD, Cm), f32)
    xp_scr[:, _WPAD + W:, :] = jnp.zeros((H + 2, _WPAD, Cm), f32)
    xp_scr[0:1, _WPAD:_WPAD + W, :] = jnp.zeros((1, W, Cm), f32)
    xp_scr[H + 1:H + 2, _WPAD:_WPAD + W, :] = jnp.zeros((1, W, Cm), f32)

    # packed per-channel BN scale/bias rows (f32)
    s1 = sbm_ref[0:1, :]; b1 = sbm_ref[1:2, :]
    s2 = sbm_ref[2:3, :]; b2 = sbm_ref[3:4, :]
    s3 = sbo_ref[0:1, :]; b3 = sbo_ref[1:2, :]

    # ---- expand 1x1 conv (+ fused shortcut 1x1 conv) on the MXU -------------
    # bf16 operands, f32 accumulation (MXU native peak on v5e/v6e/v7x).
    x2d = x_ref[...].reshape(H * W, Cin).astype(jnp.bfloat16)
    t_cat = jnp.dot(x2d, wcat_ref[...], preferred_element_type=f32)
    if has_shortcut:
        t1 = t_cat[:, :Cm]
        sc = t_cat[:, Cm:]
        ss = sbo_ref[2:3, :]
        bs = sbo_ref[3:4, :]
        # Stage the (BN-folded) shortcut branch in the VMEM-resident output
        # block so it does not stay live in vregs across the depthwise loop.
        out_ref[...] = (sc * ss + bs)[:, :Cout].reshape(
            Hout, Wout, Cout).astype(out_ref.dtype)
    else:
        t1 = t_cat
    t1 = jnp.clip(t1 * s1 + b1, 0.0, 6.0)
    # In-kernel "padding=1": store the expand output at a sublane-aligned
    # column offset so the depthwise reads its halo straight from VMEM.
    xp_scr[1:H + 1, _WPAD:_WPAD + W, :] = t1.reshape(H, W, Cm)

    # ---- depthwise 3x3 on the VPU, f32, one output row at a time ------------
    wdw = wdw_ref[...]                                            # loaded once
    taps = [wdw[kh, kw, :].reshape(1, Cm)
            for kh in range(3) for kw in range(3)]                # hoisted

    def dw_row(ho, carry):
        base = ho * stride
        acc = jnp.zeros((W, Cm), f32)                 # couple of vregs, no spill
        for kh in range(3):
            r = base + kh
            # kw = 0 / 1 / 2 windows of the padded row.
            # TODO(synk): the two unaligned windows could become pltpu.roll
            # sublane rotates of the (aligned) center row if vld pressure shows.
            acc = acc + xp_scr[r, pl.ds(_WPAD - 1, W), :] * taps[3 * kh + 0]
            acc = acc + xp_scr[r, pl.ds(_WPAD, W), :] * taps[3 * kh + 1]
            acc = acc + xp_scr[r, pl.ds(_WPAD + 1, W), :] * taps[3 * kh + 2]
        t2_scr[ho] = acc                              # each row written once
        return carry

    jax.lax.fori_loop(0, Hout, dw_row, None)

    # ---- BN2 + ReLU6, stride-2 column subsample, project 1x1 on the MXU -----
    if stride == 1:
        t2 = t2_scr[...]
    else:
        t2 = t2_scr[:, pl.ds(0, Wout, stride), :]     # one strided read / image
    t2 = t2.reshape(Hout * Wout, Cm)
    t2 = jnp.clip(t2 * s2 + b2, 0.0, 6.0).astype(jnp.bfloat16)
    y = jnp.dot(t2, w3_ref[...], preferred_element_type=f32)
    y = (y * s3 + b3)[:, :Cout].reshape(Hout, Wout, Cout)
    if has_shortcut:
        out_ref[...] = out_ref[...] + y.astype(out_ref.dtype)
    else:
        out_ref[...] = y.astype(out_ref.dtype)


# ----------------------------------------------------------------------------
# Wrapper
# ----------------------------------------------------------------------------

def _round_up(v, m):
    return -(-v // m) * m


def _pad_axis(a, target, axis):
    pad = [(0, 0)] * a.ndim
    pad[axis] = (0, target - a.shape[axis])
    return jnp.pad(a, pad)


def fold_bn(bn, eps=1e-5):
    scale = bn["gamma"] / jnp.sqrt(bn["var"] + eps)
    bias = bn["beta"] - bn["mean"] * scale
    return scale, bias


def block_forward(x_nchw, params, in_planes, out_planes, stride):
    """Pallas implementation of Block.forward.  Input/output are NCHW float32."""
    N, Cin, H, W = x_nchw.shape
    # TODO(synk): if the surrounding network runs NHWC (and accepts bf16), both
    # transposes can be dropped; the kernel itself is NHWC.
    x = jnp.transpose(x_nchw, (0, 2, 3, 1))               # NCHW -> NHWC

    Cmid = params["w1"].shape[1]
    Cout = params["w3"].shape[1]
    # TODO(synk): for layers where Cmid/Cout naturally exceed 128, round to 256
    # on v6e/v7x so the 256-wide MXU is filled; and for large H*W add a spatial
    # row-strip grid axis so per-step VMEM stays inside v7x's 64 MiB.
    Cm_p = _round_up(Cmid, 128)
    Co_p = _round_up(Cout, 128)
    Hout = (H + 2 - 3) // stride + 1
    Wout = (W + 2 - 3) // stride + 1
    has_shortcut = (stride == 1 and in_planes != out_planes)

    s1, b1 = fold_bn(params["bn1"])
    s2, b2 = fold_bn(params["bn2"])
    s3, b3 = fold_bn(params["bn3"])

    # MXU weights in bf16 (halves weight DMA + VMEM); depthwise taps and BN
    # scale/bias stay f32 (VPU path).  Padded channels are zero end-to-end.
    w1 = _pad_axis(params["w1"], Cm_p, 1).astype(jnp.bfloat16)
    if has_shortcut:
        ws = _pad_axis(params["ws"], Co_p, 1).astype(jnp.bfloat16)
        wcat = jnp.concatenate([w1, ws], axis=1)           # shared-LHS matmul
    else:
        wcat = w1
    wdw = _pad_axis(params["wdw"], Cm_p, 2).astype(jnp.float32)
    w3 = _pad_axis(_pad_axis(params["w3"], Cm_p, 0), Co_p, 1).astype(jnp.bfloat16)

    sbm = jnp.stack([_pad_axis(v, Cm_p, 0) for v in (s1, b1, s2, b2)])
    sbo_rows = [s3, b3]
    if has_shortcut:
        ss, bs = fold_bn(params["bns"])
        sbo_rows += [ss, bs]
    sbo = jnp.stack([_pad_axis(v, Co_p, 0) for v in sbo_rows])

    Ccat = wcat.shape[1]

    kernel = functools.partial(
        _block_kernel, stride=stride, H=H, W=W, Hout=Hout, Wout=Wout,
        Cout=Cout, has_shortcut=has_shortcut)

    out = pl.pallas_call(
        kernel,
        out_shape=jax.ShapeDtypeStruct((N, Hout, Wout, Cout), x.dtype),
        grid=(N,),
        in_specs=[
            pl.BlockSpec((None, H, W, Cin), lambda n: (n, 0, 0, 0)),
            pl.BlockSpec((Cin, Ccat), lambda n: (0, 0)),
            pl.BlockSpec((3, 3, Cm_p), lambda n: (0, 0, 0)),
            pl.BlockSpec((Cm_p, Co_p), lambda n: (0, 0)),
            pl.BlockSpec(sbm.shape, lambda n: (0, 0)),
            pl.BlockSpec(sbo.shape, lambda n: (0, 0)),
        ],
        out_specs=pl.BlockSpec((None, Hout, Wout, Cout), lambda n: (n, 0, 0, 0)),
        scratch_shapes=[
            pltpu.VMEM((H + 2, W + 2 * _WPAD, Cm_p), jnp.float32),  # padded act
            pltpu.VMEM((Hout, W, Cm_p), jnp.float32),               # dw rows
        ],
        compiler_params=pltpu.CompilerParams(
            dimension_semantics=("parallel",),          # batch shards on v7x TCs
            vmem_limit_bytes=32 * 1024 * 1024),
    )(x, wcat, wdw, w3, sbm, sbo)

    return jnp.transpose(out, (0, 3, 1, 2))              # NHWC -> NCHW


# ----------------------------------------------------------------------------
# Parameter construction
# ----------------------------------------------------------------------------

def make_block_params(key, in_planes, out_planes, expansion, stride):
    ch_in, ch_mid, ch_out = in_planes, expansion * in_planes, out_planes
    keys = jax.random.split(key, 8)

    def bn_params(k, c):
        k1, k2, k3, k4 = jax.random.split(k, 4)
        return dict(
            gamma=jax.random.uniform(k1, (c,), jnp.float32, 0.5, 1.5),
            beta=0.1 * jax.random.normal(k2, (c,), jnp.float32),
            mean=0.1 * jax.random.normal(k3, (c,), jnp.float32),
            var=jax.random.uniform(k4, (c,), jnp.float32, 0.5, 1.5),
        )

    p = dict(
        w1=0.3 * jax.random.normal(keys[0], (ch_in, ch_mid), jnp.float32),
        bn1=bn_params(keys[1], ch_mid),
        wdw=0.3 * jax.random.normal(keys[2], (3, 3, ch_mid), jnp.float32),
        bn2=bn_params(keys[3], ch_mid),
        w3=0.3 * jax.random.normal(keys[4], (ch_mid, ch_out), jnp.float32),
        bn3=bn_params(keys[5], ch_out),
    )
    if stride == 1 and in_planes != out_planes:
        p["ws"] = 0.3 * jax.random.normal(keys[6], (ch_in, ch_out), jnp.float32)
        p["bns"] = bn_params(keys[7], ch_out)
    return p


# ----------------------------------------------------------------------------
# Pure-JAX reference (for verification)
# ----------------------------------------------------------------------------

def ref_forward(x_nchw, params, in_planes, out_planes, stride):
    x = jnp.transpose(x_nchw, (0, 2, 3, 1))

    def conv1x1(y, w):
        return jax.lax.conv_general_dilated(
            y, w[None, None], (1, 1), "VALID",
            dimension_numbers=("NHWC", "HWIO", "NHWC"))

    def dwconv(y, w, s):
        c = w.shape[-1]
        return jax.lax.conv_general_dilated(
            y, w[:, :, None, :], (s, s), ((1, 1), (1, 1)),
            dimension_numbers=("NHWC", "HWIO", "NHWC"),
            feature_group_count=c)

    def bn(y, p):
        sc, bi = fold_bn(p)
        return y * sc + bi

    out = jnp.clip(bn(conv1x1(x, params["w1"]), params["bn1"]), 0.0, 6.0)
    out = jnp.clip(bn(dwconv(out, params["wdw"], stride), params["bn2"]), 0.0, 6.0)
    out = bn(conv1x1(out, params["w3"]), params["bn3"])
    if stride == 1 and in_planes != out_planes:
        out = out + bn(conv1x1(x, params["ws"]), params["bns"])
    return jnp.transpose(out, (0, 3, 1, 2))


# ----------------------------------------------------------------------------
# Main
# ----------------------------------------------------------------------------

if __name__ == "__main__":
    key = jax.random.PRNGKey(0)
    kx, kp1, kp2, kp3 = jax.random.split(key, 4)

    x = jax.random.normal(kx, (2, 4, 16, 16), jnp.float32)  # NCHW, like PyTorch

    configs = [
        # (in_planes, out_planes, expansion, stride)
        (4, 8, 6, 1),   # stride=1, in!=out -> conv shortcut fused into the kernel
        (4, 8, 6, 2),   # stride=2 -> spatial downsample, no shortcut
        (4, 4, 6, 1),   # stride=1, in==out -> per the module spec: NO residual add
    ]
    for (in_p, out_p, exp, stride), kparam in zip(configs, [kp1, kp2, kp3]):
        params = make_block_params(kparam, in_p, out_p, exp, stride)
        y = jax.block_until_ready(block_forward(x, params, in_p, out_p, stride))
        y_ref = jax.block_until_ready(ref_forward(x, params, in_p, out_p, stride))
        # bf16 MXU operands (deliberate, per perf review) -> ~1e-3-level relative
        # differences vs the XLA reference are expected.
        np.testing.assert_allclose(np.asarray(y), np.asarray(y_ref),
                                   rtol=1e-2, atol=1e-2)

    print("KERNEL_OK")
</pallas_src>

<mosaic_0001>
module attributes {stable_mosaic.version = 11 : i64} {
  func.func @_block_kernel(%arg0: i32, %arg1: memref<1x16x16x4xf32, #tpu.memory_space<vmem>>, %arg2: memref<4x256xbf16, #tpu.memory_space<vmem>>, %arg3: memref<3x3x128xf32, #tpu.memory_space<vmem>>, %arg4: memref<128x128xbf16, #tpu.memory_space<vmem>>, %arg5: memref<4x128xf32, #tpu.memory_space<vmem>>, %arg6: memref<4x128xf32, #tpu.memory_space<vmem>>, %arg7: memref<1x16x16x8xf32, #tpu.memory_space<vmem>>, %arg8: memref<18x32x128xf32, #tpu.memory_space<vmem>>, %arg9: memref<16x16x128xf32, #tpu.memory_space<vmem>>) attributes {dimension_semantics = [#tpu.dimension_semantics<parallel>], iteration_bounds = array<i64: 2>, scalar_prefetch = 0 : i64, scratch_operands = 2 : i64, tpu.core_type = #tpu.core_type<tc>, window_params = [{transform_indices = @transform_0, window_bounds = array<i64: 1, 16, 16, 4>}, {pipeline_mode = #tpu.pipeline_mode<synchronous>, transform_indices = @transform_1, window_bounds = array<i64: 4, 256>}, {pipeline_mode = #tpu.pipeline_mode<synchronous>, transform_indices = @transform_2, window_bounds = array<i64: 3, 3, 128>}, {pipeline_mode = #tpu.pipeline_mode<synchronous>, transform_indices = @transform_3, window_bounds = array<i64: 128, 128>}, {pipeline_mode = #tpu.pipeline_mode<synchronous>, transform_indices = @transform_4, window_bounds = array<i64: 4, 128>}, {pipeline_mode = #tpu.pipeline_mode<synchronous>, transform_indices = @transform_5, window_bounds = array<i64: 4, 128>}, {transform_indices = @transform_6, window_bounds = array<i64: 1, 16, 16, 8>}]} {
    %cst = arith.constant 0.000000e+00 : f32
    %0 = vector.broadcast %cst : f32 to vector<18x8x128xf32>
    %c0 = arith.constant 0 : index
    %c0_0 = arith.constant 0 : index
    %c0_1 = arith.constant 0 : index
    %1 = vector.load %arg8[%c0, %c0_0, %c0_1] : memref<18x32x128xf32, #tpu.memory_space<vmem>>, vector<18x8x128xf32>
    tpu.vector_store %arg8[%c0, %c0_0, %c0_1], %0 {strides = array<i32>} : memref<18x32x128xf32, #tpu.memory_space<vmem>>, vector<18x8x128xf32>,
    %cst_2 = arith.constant 0.000000e+00 : f32
    %2 = vector.broadcast %cst_2 : f32 to vector<18x8x128xf32>
    %c0_3 = arith.constant 0 : index
    %c24 = arith.constant 24 : index
    %c0_4 = arith.constant 0 : index
    %3 = vector.load %arg8[%c0_3, %c24, %c0_4] : memref<18x32x128xf32, #tpu.memory_space<vmem>>, vector<18x8x128xf32>
    tpu.vector_store %arg8[%c0_3, %c24, %c0_4], %2 {strides = array<i32>} : memref<18x32x128xf32, #tpu.memory_space<vmem>>, vector<18x8x128xf32>,
    %cst_5 = arith.constant 0.000000e+00 : f32
    %4 = vector.broadcast %cst_5 : f32 to vector<1x16x128xf32>
    %c0_6 = arith.constant 0 : index
    %c8 = arith.constant 8 : index
    %c0_7 = arith.constant 0 : index
    %5 = vector.load %arg8[%c0_6, %c8, %c0_7] : memref<18x32x128xf32, #tpu.memory_space<vmem>>, vector<1x16x128xf32>
    tpu.vector_store %arg8[%c0_6, %c8, %c0_7], %4 {strides = array<i32>} : memref<18x32x128xf32, #tpu.memory_space<vmem>>, vector<1x16x128xf32>,
    %cst_8 = arith.constant 0.000000e+00 : f32
    %6 = vector.broadcast %cst_8 : f32 to vector<1x16x128xf32>
    %c17 = arith.constant 17 : index
    %c8_9 = arith.constant 8 : index
    %c0_10 = arith.constant 0 : index
    %7 = vector.load %arg8[%c17, %c8_9, %c0_10] : memref<18x32x128xf32, #tpu.memory_space<vmem>>, vector<1x16x128xf32>
    tpu.vector_store %arg8[%c17, %c8_9, %c0_10], %6 {strides = array<i32>} : memref<18x32x128xf32, #tpu.memory_space<vmem>>, vector<1x16x128xf32>,
    %c0_11 = arith.constant 0 : index
    %c0_12 = arith.constant 0 : index
    %8 = vector.load %arg5[%c0_11, %c0_12] : memref<4x128xf32, #tpu.memory_space<vmem>>, vector<1x128xf32>
    %c1 = arith.constant 1 : index
    %c0_13 = arith.constant 0 : index
    %9 = vector.load %arg5[%c1, %c0_13] : memref<4x128xf32, #tpu.memory_space<vmem>>, vector<1x128xf32>
    %c2 = arith.constant 2 : index
    %c0_14 = arith.constant 0 : index
    %10 = vector.load %arg5[%c2, %c0_14] : memref<4x128xf32, #tpu.memory_space<vmem>>, vector<1x128xf32>
    %c3 = arith.constant 3 : index
    %c0_15 = arith.constant 0 : index
    %11 = vector.load %arg5[%c3, %c0_15] : memref<4x128xf32, #tpu.memory_space<vmem>>, vector<1x128xf32>
    %c0_16 = arith.constant 0 : index
    %c0_17 = arith.constant 0 : index
    %12 = vector.load %arg6[%c0_16, %c0_17] : memref<4x128xf32, #tpu.memory_space<vmem>>, vector<1x128xf32>
    %c1_18 = arith.constant 1 : index
    %c0_19 = arith.constant 0 : index
    %13 = vector.load %arg6[%c1_18, %c0_19] : memref<4x128xf32, #tpu.memory_space<vmem>>, vector<1x128xf32>
    %c0_20 = arith.constant 0 : index
    %c0_21 = arith.constant 0 : index
    %c0_22 = arith.constant 0 : index
    %c0_23 = arith.constant 0 : index
    %14 = vector.load %arg1[%c0_20, %c0_21, %c0_22, %c0_23] : memref<1x16x16x4xf32, #tpu.memory_space<vmem>>, vector<1x16x16x4xf32>
    %15 = vector.shape_cast %14 : vector<1x16x16x4xf32> to vector<16x16x4xf32>
    %16 = vector.shape_cast %15 : vector<16x16x4xf32> to vector<256x4xf32>
    %17 = arith.truncf %16 : vector<256x4xf32> to vector<256x4xbf16>
    %c0_24 = arith.constant 0 : index
    %c0_25 = arith.constant 0 : index
    %18 = vector.load %arg2[%c0_24, %c0_25] : memref<4x256xbf16, #tpu.memory_space<vmem>>, vector<4x256xbf16>
    %cst_26 = arith.constant dense<0.000000e+00> : vector<256x256xf32>
    %19 = tpu.matmul %17, %18, %cst_26 {dimension_numbers = #tpu.dot_dimension_numbers<[1], [0], [0], [1], [0, 0, 1, 1], [], []>} : vector<256x4xbf16>, vector<4x256xbf16>, vector<256x256xf32> -> vector<256x256xf32>
    %20 = vector.extract_strided_slice %19 {offsets = [0, 0], sizes = [256, 128], strides = [1, 1]} : vector<256x256xf32> to vector<256x128xf32>
    %21 = vector.extract_strided_slice %19 {offsets = [0, 128], sizes = [256, 128], strides = [1, 1]} : vector<256x256xf32> to vector<256x128xf32>
    %c2_27 = arith.constant 2 : index
    %c0_28 = arith.constant 0 : index
    %22 = vector.load %arg6[%c2_27, %c0_28] : memref<4x128xf32, #tpu.memory_space<vmem>>, vector<1x128xf32>
    %c3_29 = arith.constant 3 : index
    %c0_30 = arith.constant 0 : index
    %23 = vector.load %arg6[%c3_29, %c0_30] : memref<4x128xf32, #tpu.memory_space<vmem>>, vector<1x128xf32>
    %24 = vector.broadcast %22 : vector<1x128xf32> to vector<256x128xf32>
    %25 = arith.mulf %21, %24 : vector<256x128xf32>
    %26 = vector.broadcast %23 : vector<1x128xf32> to vector<256x128xf32>
    %27 = arith.addf %25, %26 : vector<256x128xf32>
    %28 = vector.extract_strided_slice %27 {offsets = [0, 0], sizes = [256, 8], strides = [1, 1]} : vector<256x128xf32> to vector<256x8xf32>
    %29 = vector.shape_cast %28 : vector<256x8xf32> to vector<16x16x8xf32>
    %c0_31 = arith.constant 0 : index
    %c0_32 = arith.constant 0 : index
    %c0_33 = arith.constant 0 : index
    %c0_34 = arith.constant 0 : index
    %30 = vector.load %arg7[%c0_31, %c0_32, %c0_33, %c0_34] : memref<1x16x16x8xf32, #tpu.memory_space<vmem>>, vector<1x16x16x8xf32>
    %31 = vector.shape_cast %30 : vector<1x16x16x8xf32> to vector<16x16x8xf32>
    %32 = vector.shape_cast %29 : vector<16x16x8xf32> to vector<1x16x16x8xf32>
    tpu.vector_store %arg7[%c0_31, %c0_32, %c0_33, %c0_34], %32 {strides = array<i32>} : memref<1x16x16x8xf32, #tpu.memory_space<vmem>>, vector<1x16x16x8xf32>,
    %33 = vector.broadcast %8 : vector<1x128xf32> to vector<256x128xf32>
    %34 = arith.mulf %20, %33 : vector<256x128xf32>
    %35 = vector.broadcast %9 : vector<1x128xf32> to vector<256x128xf32>
    %36 = arith.addf %34, %35 : vector<256x128xf32>
    %cst_35 = arith.constant 0.000000e+00 : f32
    %cst_36 = arith.constant 6.000000e+00 : f32
    %37 = vector.broadcast %cst_35 : f32 to vector<256x128xf32>
    %38 = arith.maximumf %37, %36 : vector<256x128xf32>
    %39 = vector.broadcast %cst_36 : f32 to vector<256x128xf32>
    %40 = arith.minimumf %39, %38 : vector<256x128xf32>
    %41 = vector.shape_cast %40 : vector<256x128xf32> to vector<16x16x128xf32>
    %c1_37 = arith.constant 1 : index
    %c8_38 = arith.constant 8 : index
    %c0_39 = arith.constant 0 : index
    %42 = vector.load %arg8[%c1_37, %c8_38, %c0_39] : memref<18x32x128xf32, #tpu.memory_space<vmem>>, vector<16x16x128xf32>
    tpu.vector_store %arg8[%c1_37, %c8_38, %c0_39], %41 {strides = array<i32>} : memref<18x32x128xf32, #tpu.memory_space<vmem>>, vector<16x16x128xf32>,
    %c0_40 = arith.constant 0 : index
    %c0_41 = arith.constant 0 : index
    %c0_42 = arith.constant 0 : index
    %43 = vector.load %arg3[%c0_40, %c0_41, %c0_42] : memref<3x3x128xf32, #tpu.memory_space<vmem>>, vector<3x3x128xf32>
    %44 = vector.extract_strided_slice %43 {offsets = [0, 0, 0], sizes = [1, 1, 128], strides = [1, 1, 1]} : vector<3x3x128xf32> to vector<1x1x128xf32>
    %45 = vector.shape_cast %44 : vector<1x1x128xf32> to vector<128xf32>
    %46 = vector.shape_cast %45 : vector<128xf32> to vector<1x128xf32>
    %47 = vector.extract_strided_slice %43 {offsets = [0, 1, 0], sizes = [1, 1, 128], strides = [1, 1, 1]} : vector<3x3x128xf32> to vector<1x1x128xf32>
    %48 = vector.shape_cast %47 : vector<1x1x128xf32> to vector<128xf32>
    %49 = vector.shape_cast %48 : vector<128xf32> to vector<1x128xf32>
    %50 = vector.extract_strided_slice %43 {offsets = [0, 2, 0], sizes = [1, 1, 128], strides = [1, 1, 1]} : vector<3x3x128xf32> to vector<1x1x128xf32>
    %51 = vector.shape_cast %50 : vector<1x1x128xf32> to vector<128xf32>
    %52 = vector.shape_cast %51 : vector<128xf32> to vector<1x128xf32>
    %53 = vector.extract_strided_slice %43 {offsets = [1, 0, 0], sizes = [1, 1, 128], strides = [1, 1, 1]} : vector<3x3x128xf32> to vector<1x1x128xf32>
    %54 = vector.shape_cast %53 : vector<1x1x128xf32> to vector<128xf32>
    %55 = vector.shape_cast %54 : vector<128xf32> to vector<1x128xf32>
    %56 = vector.extract_strided_slice %43 {offsets = [1, 1, 0], sizes = [1, 1, 128], strides = [1, 1, 1]} : vector<3x3x128xf32> to vector<1x1x128xf32>
    %57 = vector.shape_cast %56 : vector<1x1x128xf32> to vector<128xf32>
    %58 = vector.shape_cast %57 : vector<128xf32> to vector<1x128xf32>
    %59 = vector.extract_strided_slice %43 {offsets = [1, 2, 0], sizes = [1, 1, 128], strides = [1, 1, 1]} : vector<3x3x128xf32> to vector<1x1x128xf32>
    %60 = vector.shape_cast %59 : vector<1x1x128xf32> to vector<128xf32>
    %61 = vector.shape_cast %60 : vector<128xf32> to vector<1x128xf32>
    %62 = vector.extract_strided_slice %43 {offsets = [2, 0, 0], sizes = [1, 1, 128], strides = [1, 1, 1]} : vector<3x3x128xf32> to vector<1x1x128xf32>
    %63 = vector.shape_cast %62 : vector<1x1x128xf32> to vector<128xf32>
    %64 = vector.shape_cast %63 : vector<128xf32> to vector<1x128xf32>
    %65 = vector.extract_strided_slice %43 {offsets = [2, 1, 0], sizes = [1, 1, 128], strides = [1, 1, 1]} : vector<3x3x128xf32> to vector<1x1x128xf32>
    %66 = vector.shape_cast %65 : vector<1x1x128xf32> to vector<128xf32>
    %67 = vector.shape_cast %66 : vector<128xf32> to vector<1x128xf32>
    %68 = vector.extract_strided_slice %43 {offsets = [2, 2, 0], sizes = [1, 1, 128], strides = [1, 1, 1]} : vector<3x3x128xf32> to vector<1x1x128xf32>
    %69 = vector.shape_cast %68 : vector<1x1x128xf32> to vector<128xf32>
    %70 = vector.shape_cast %69 : vector<128xf32> to vector<1x128xf32>
    %c0_i32 = arith.constant 0 : i32
    %c16_i32 = arith.constant 16 : i32
    %71 = arith.addi %c0_i32, %c16_i32 : i32
    %c1_i32 = arith.constant 1 : i32
    scf.for %arg10 = %c0_i32 to %71 step %c1_i32  : i32 {
      %c1_i32_60 = arith.constant 1 : i32
      %97 = arith.muli %arg10, %c1_i32_60 : i32
      %cst_61 = arith.constant 0.000000e+00 : f32
      %98 = vector.broadcast %cst_61 : f32 to vector<16x128xf32>
      %c0_i32_62 = arith.constant 0 : i32
      %99 = arith.addi %97, %c0_i32_62 : i32
      %100 = arith.index_cast %99 : i32 to index
      %c7 = arith.constant 7 : index
      %c0_63 = arith.constant 0 : index
      %101 = vector.load %arg8[%100, %c7, %c0_63] : memref<18x32x128xf32, #tpu.memory_space<vmem>>, vector<1x16x128xf32>
      %102 = vector.shape_cast %101 : vector<1x16x128xf32> to vector<16x128xf32>
      %103 = vector.broadcast %46 : vector<1x128xf32> to vector<16x128xf32>
      %104 = arith.mulf %102, %103 : vector<16x128xf32>
      %105 = arith.addf %98, %104 : vector<16x128xf32>
      %106 = arith.index_cast %99 : i32 to index
      %c8_64 = arith.constant 8 : index
      %c0_65 = arith.constant 0 : index
      %107 = vector.load %arg8[%106, %c8_64, %c0_65] : memref<18x32x128xf32, #tpu.memory_space<vmem>>, vector<1x16x128xf32>
      %108 = vector.shape_cast %107 : vector<1x16x128xf32> to vector<16x128xf32>
      %109 = vector.broadcast %49 : vector<1x128xf32> to vector<16x128xf32>
      %110 = arith.mulf %108, %109 : vector<16x128xf32>
      %111 = arith.addf %105, %110 : vector<16x128xf32>
      %112 = arith.index_cast %99 : i32 to index
      %c9 = arith.constant 9 : index
      %c0_66 = arith.constant 0 : index
      %113 = vector.load %arg8[%112, %c9, %c0_66] : memref<18x32x128xf32, #tpu.memory_space<vmem>>, vector<1x16x128xf32>
      %114 = vector.shape_cast %113 : vector<1x16x128xf32> to vector<16x128xf32>
      %115 = vector.broadcast %52 : vector<1x128xf32> to vector<16x128xf32>
      %116 = arith.mulf %114, %115 : vector<16x128xf32>
      %117 = arith.addf %111, %116 : vector<16x128xf32>
      %c1_i32_67 = arith.constant 1 : i32
      %118 = arith.addi %97, %c1_i32_67 : i32
      %119 = arith.index_cast %118 : i32 to index
      %c7_68 = arith.constant 7 : index
      %c0_69 = arith.constant 0 : index
      %120 = vector.load %arg8[%119, %c7_68, %c0_69] : memref<18x32x128xf32, #tpu.memory_space<vmem>>, vector<1x16x128xf32>
      %121 = vector.shape_cast %120 : vector<1x16x128xf32> to vector<16x128xf32>
      %122 = vector.broadcast %55 : vector<1x128xf32> to vector<16x128xf32>
      %123 = arith.mulf %121, %122 : vector<16x128xf32>
      %124 = arith.addf %117, %123 : vector<16x128xf32>
      %125 = arith.index_cast %118 : i32 to index
      %c8_70 = arith.constant 8 : index
      %c0_71 = arith.constant 0 : index
      %126 = vector.load %arg8[%125, %c8_70, %c0_71] : memref<18x32x128xf32, #tpu.memory_space<vmem>>, vector<1x16x128xf32>
      %127 = vector.shape_cast %126 : vector<1x16x128xf32> to vector<16x128xf32>
      %128 = vector.broadcast %58 : vector<1x128xf32> to vector<16x128xf32>
      %129 = arith.mulf %127, %128 : vector<16x128xf32>
      %130 = arith.addf %124, %129 : vector<16x128xf32>
      %131 = arith.index_cast %118 : i32 to index
      %c9_72 = arith.constant 9 : index
      %c0_73 = arith.constant 0 : index
      %132 = vector.load %arg8[%131, %c9_72, %c0_73] : memref<18x32x128xf32, #tpu.memory_space<vmem>>, vector<1x16x128xf32>
      %133 = vector.shape_cast %132 : vector<1x16x128xf32> to vector<16x128xf32>
      %134 = vector.broadcast %61 : vector<1x128xf32> to vector<16x128xf32>
      %135 = arith.mulf %133, %134 : vector<16x128xf32>
      %136 = arith.addf %130, %135 : vector<16x128xf32>
      %c2_i32 = arith.constant 2 : i32
      %137 = arith.addi %97, %c2_i32 : i32
      %138 = arith.index_cast %137 : i32 to index
      %c7_74 = arith.constant 7 : index
      %c0_75 = arith.constant 0 : index
      %139 = vector.load %arg8[%138, %c7_74, %c0_75] : memref<18x32x128xf32, #tpu.memory_space<vmem>>, vector<1x16x128xf32>
      %140 = vector.shape_cast %139 : vector<1x16x128xf32> to vector<16x128xf32>
      %141 = vector.broadcast %64 : vector<1x128xf32> to vector<16x128xf32>
      %142 = arith.mulf %140, %141 : vector<16x128xf32>
      %143 = arith.addf %136, %142 : vector<16x128xf32>
      %144 = arith.index_cast %137 : i32 to index
      %c8_76 = arith.constant 8 : index
      %c0_77 = arith.constant 0 : index
      %145 = vector.load %arg8[%144, %c8_76, %c0_77] : memref<18x32x128xf32, #tpu.memory_space<vmem>>, vector<1x16x128xf32>
      %146 = vector.shape_cast %145 : vector<1x16x128xf32> to vector<16x128xf32>
      %147 = vector.broadcast %67 : vector<1x128xf32> to vector<16x128xf32>
      %148 = arith.mulf %146, %147 : vector<16x128xf32>
      %149 = arith.addf %143, %148 : vector<16x128xf32>
      %150 = arith.index_cast %137 : i32 to index
      %c9_78 = arith.constant 9 : index
      %c0_79 = arith.constant 0 : index
      %151 = vector.load %arg8[%150, %c9_78, %c0_79] : memref<18x32x128xf32, #tpu.memory_space<vmem>>, vector<1x16x128xf32>
      %152 = vector.shape_cast %151 : vector<1x16x128xf32> to vector<16x128xf32>
      %153 = vector.broadcast %70 : vector<1x128xf32> to vector<16x128xf32>
      %154 = arith.mulf %152, %153 : vector<16x128xf32>
      %155 = arith.addf %149, %154 : vector<16x128xf32>
      %156 = arith.index_cast %arg10 : i32 to index
      %c0_80 = arith.constant 0 : index
      %c0_81 = arith.constant 0 : index
      %157 = vector.load %arg9[%156, %c0_80, %c0_81] : memref<16x16x128xf32, #tpu.memory_space<vmem>>, vector<1x16x128xf32>
      %158 = vector.shape_cast %157 : vector<1x16x128xf32> to vector<16x128xf32>
      %159 = vector.shape_cast %155 : vector<16x128xf32> to vector<1x16x128xf32>
      tpu.vector_store %arg9[%156, %c0_80, %c0_81], %159 {strides = array<i32>} : memref<16x16x128xf32, #tpu.memory_space<vmem>>, vector<1x16x128xf32>,
    }
    %c16_i32_43 = arith.constant 16 : i32
    %c0_44 = arith.constant 0 : index
    %c0_45 = arith.constant 0 : index
    %c0_46 = arith.constant 0 : index
    %72 = vector.load %arg9[%c0_44, %c0_45, %c0_46] : memref<16x16x128xf32, #tpu.memory_space<vmem>>, vector<16x16x128xf32>
    %73 = vector.shape_cast %72 : vector<16x16x128xf32> to vector<256x128xf32>
    %74 = vector.broadcast %10 : vector<1x128xf32> to vector<256x128xf32>
    %75 = arith.mulf %73, %74 : vector<256x128xf32>
    %76 = vector.broadcast %11 : vector<1x128xf32> to vector<256x128xf32>
    %77 = arith.addf %75, %76 : vector<256x128xf32>
    %cst_47 = arith.constant 0.000000e+00 : f32
    %cst_48 = arith.constant 6.000000e+00 : f32
    %78 = vector.broadcast %cst_47 : f32 to vector<256x128xf32>
    %79 = arith.maximumf %78, %77 : vector<256x128xf32>
    %80 = vector.broadcast %cst_48 : f32 to vector<256x128xf32>
    %81 = arith.minimumf %80, %79 : vector<256x128xf32>
    %82 = arith.truncf %81 : vector<256x128xf32> to vector<256x128xbf16>
    %c0_49 = arith.constant 0 : index
    %c0_50 = arith.constant 0 : index
    %83 = vector.load %arg4[%c0_49, %c0_50] : memref<128x128xbf16, #tpu.memory_space<vmem>>, vector<128x128xbf16>
    %cst_51 = arith.constant dense<0.000000e+00> : vector<256x128xf32>
    %84 = tpu.matmul %82, %83, %cst_51 {dimension_numbers = #tpu.dot_dimension_numbers<[1], [0], [0], [1], [0, 0, 1, 1], [], []>} : vector<256x128xbf16>, vector<128x128xbf16>, vector<256x128xf32> -> vector<256x128xf32>
    %85 = vector.broadcast %12 : vector<1x128xf32> to vector<256x128xf32>
    %86 = arith.mulf %84, %85 : vector<256x128xf32>
    %87 = vector.broadcast %13 : vector<1x128xf32> to vector<256x128xf32>
    %88 = arith.addf %86, %87 : vector<256x128xf32>
    %89 = vector.extract_strided_slice %88 {offsets = [0, 0], sizes = [256, 8], strides = [1, 1]} : vector<256x128xf32> to vector<256x8xf32>
    %90 = vector.shape_cast %89 : vector<256x8xf32> to vector<16x16x8xf32>
    %c0_52 = arith.constant 0 : index
    %c0_53 = arith.constant 0 : index
    %c0_54 = arith.constant 0 : index
    %c0_55 = arith.constant 0 : index
    %91 = vector.load %arg7[%c0_52, %c0_53, %c0_54, %c0_55] : memref<1x16x16x8xf32, #tpu.memory_space<vmem>>, vector<1x16x16x8xf32>
    %92 = vector.shape_cast %91 : vector<1x16x16x8xf32> to vector<16x16x8xf32>
    %93 = arith.addf %92, %90 : vector<16x16x8xf32>
    %c0_56 = arith.constant 0 : index
    %c0_57 = arith.constant 0 : index
    %c0_58 = arith.constant 0 : index
    %c0_59 = arith.constant 0 : index
    %94 = vector.load %arg7[%c0_56, %c0_57, %c0_58, %c0_59] : memref<1x16x16x8xf32, #tpu.memory_space<vmem>>, vector<1x16x16x8xf32>
    %95 = vector.shape_cast %94 : vector<1x16x16x8xf32> to vector<16x16x8xf32>
    %96 = vector.shape_cast %93 : vector<16x16x8xf32> to vector<1x16x16x8xf32>
    tpu.vector_store %arg7[%c0_56, %c0_57, %c0_58, %c0_59], %96 {strides = array<i32>} : memref<1x16x16x8xf32, #tpu.memory_space<vmem>>, vector<1x16x16x8xf32>,
    return
  }
  func.func @transform_0(%arg0: i32) -> (i32, i32, i32, i32) {
    %c0_i32 = arith.constant 0 : i32
    %c0_i32_0 = arith.constant 0 : i32
    %c0_i32_1 = arith.constant 0 : i32
    %c0_i32_2 = arith.constant 0 : i32
    return %arg0, %c0_i32, %c0_i32_0, %c0_i32_1 : i32, i32, i32, i32
  }
  func.func @transform_1(%arg0: i32) -> (i32, i32) {
    %c0_i32 = arith.constant 0 : i32
    %c0_i32_0 = arith.constant 0 : i32
    %c0_i32_1 = arith.constant 0 : i32
    return %c0_i32, %c0_i32_0 : i32, i32
  }
  func.func @transform_2(%arg0: i32) -> (i32, i32, i32) {
    %c0_i32 = arith.constant 0 : i32
    %c0_i32_0 = arith.constant 0 : i32
    %c0_i32_1 = arith.constant 0 : i32
    %c0_i32_2 = arith.constant 0 : i32
    return %c0_i32, %c0_i32_0, %c0_i32_1 : i32, i32, i32
  }
  func.func @transform_3(%arg0: i32) -> (i32, i32) {
    %c0_i32 = arith.constant 0 : i32
    %c0_i32_0 = arith.constant 0 : i32
    %c0_i32_1 = arith.constant 0 : i32
    return %c0_i32, %c0_i32_0 : i32, i32
  }
  func.func @transform_4(%arg0: i32) -> (i32, i32) {
    %c0_i32 = arith.constant 0 : i32
    %c0_i32_0 = arith.constant 0 : i32
    %c0_i32_1 = arith.constant 0 : i32
    return %c0_i32, %c0_i32_0 : i32, i32
  }
  func.func @transform_5(%arg0: i32) -> (i32, i32) {
    %c0_i32 = arith.constant 0 : i32
    %c0_i32_0 = arith.constant 0 : i32
    %c0_i32_1 = arith.constant 0 : i32
    return %c0_i32, %c0_i32_0 : i32, i32
  }
  func.func @transform_6(%arg0: i32) -> (i32, i32, i32, i32) {
    %c0_i32 = arith.constant 0 : i32
    %c0_i32_0 = arith.constant 0 : i32
    %c0_i32_1 = arith.constant 0 : i32
    %c0_i32_2 = arith.constant 0 : i32
    return %arg0, %c0_i32, %c0_i32_0, %c0_i32_1 : i32, i32, i32, i32
  }
}

</mosaic_0001>

<llo_original>
// kernel: tpu_custom_call.1
$region0: #{tpu_custom_call.1}
  #allocation0 [shape = 'u32[]', space=smem, size = 0x4, offset = 0x4, fixed_abs, tag = 'smem constant byte address 0x4 - core index']
  #allocation1 [shape = 'u32[72,128]{1,0:T(1,128)}', space=vmem, size = 0x9000, scoped, tag = 'internal scratch']
  #allocation2 [shape = 'f32[18,32,128]{2,1,0:T(8,128)}', space=vmem, size = 0x48000, scoped, tag = 'scratch operand']
  #allocation3 [shape = 'f32[16,16,128]{2,1,0:T(8,128)}', space=vmem, size = 0x20000, scoped, tag = 'scratch operand']
  %s0 = inlined_call_operand.vmem [shape: f32[2,16,16,4], index: 0, kind: input, shape index: {}]
  %s1 = inlined_call_operand.vmem [shape: bf16[4,256], index: 1, kind: input, shape index: {}]
  %s2 = inlined_call_operand.vmem [shape: f32[3,3,128], index: 2, kind: input, shape index: {}]
  %s3 = inlined_call_operand.vmem [shape: bf16[128,128], index: 3, kind: input, shape index: {}]
  %s4 = inlined_call_operand.vmem [shape: f32[4,128], index: 4, kind: input, shape index: {}]
  %s5 = inlined_call_operand.vmem [shape: f32[4,128], index: 5, kind: input, shape index: {}]
  %s6 = inlined_call_operand.vmem [shape: f32[2,16,16,8], index: 6, kind: output, shape index: {}]
  %s7 = sld [smem:[#allocation0]]
  $region64: #{tpu_custom_call.1} parent=0
    _
  %s9 = ssub.s32 1, %s7
  %s10 = scalar_select 0, %s9, %s7
  loop: start=0, step=1, limit=4
  $region2: #{tpu_custom_call.1} parent=0 // loop_pre_header
    _
  $region3: #{tpu_custom_call.1} parent=0 // loop_header
    %s12 = sphi 0, %s16
    %p13 = scmp.ge.s32.totalorder %s12, 4
    %s22 = sphi 0, %s24
    %s25 = sphi 0, %s22
    %s26 = sphi 0, %s25
    %s42 = sphi 0, %s26
    %s46 = sphi 0, %s46
    %s48 = sphi 0, %s46
    %s49 = sphi 0, %s48
    %s63 = sphi 0, %s49
    %s67 = sphi 0, %s67
    %s69 = sphi 0, %s67
    %s70 = sphi 0, %s69
    %s84 = sphi 0, %s70
    %s88 = sphi 0, %s88
    %s90 = sphi 0, %s88
    %s91 = sphi 0, %s90
    %s105 = sphi 0, %s91
    %s109 = sphi 0, %s109
    %s111 = sphi 0, %s109
    %s112 = sphi 0, %s111
    %s126 = sphi 0, %s112
    %s130 = sphi 0, %s130
    %s132 = sphi 0, %s130
    %s133 = sphi 0, %s132
    %s147 = sphi 0, %s133
    %s153 = sphi 0, %s155
    %s156 = sphi 0, %s153
    %s157 = sphi 0, %s156
    %s173 = sphi 0, %s157
  $region4: #{tpu_custom_call.1} parent=0 // loop_header_branch
    %15 = sbr.rel (%p13) target = $region8
  $region5: #{tpu_custom_call.1} parent=0 // loop_body
    %s17 = ssub.s32 %s12, 1
    %s18 = ssub.s32 %s12, 2
    %s19 = sadd.s32 %s12, 1
    %s20 = ssub.s32 %s12, %s19
    %p21 = scmp.eq.s32.totalorder %s20, 0
    %s23 = sadd.s32 %s22, 1
    %s24 = scalar_select %p21, %s22, %s23
    %p27 = pneg %p21
    %p28 = scmp.eq.s32.totalorder %s12, 1
    %p29 = por %p27, %p28
    %p30 = scmp.ne.s32.totalorder %s22, %s25
    %p31 = scmp.eq.s32.totalorder %s12, 0
    %p32 = por %p30, %p31
    %p33 = scmp.ne.s32.totalorder %s22, %s25
    %p34 = scmp.eq.s32.totalorder %s17, 1
    %p35 = por %p33, %p34
    %p36 = scmp.ne.s32.totalorder %s25, %s26
    %p37 = scmp.eq.s32.totalorder %s17, 0
    %p38 = por %p36, %p37
    %p39 = scmp.ne.s32.totalorder %s25, %s26
    %p40 = scmp.eq.s32.totalorder %s18, 1
    %p41 = por %p39, %p40
    %p43 = scmp.ne.s32.totalorder %s26, %s42
    %p44 = scmp.eq.s32.totalorder %s18, 0
    %p45 = por %p43, %p44
    %s47 = sadd.s32 %s46, 1
    %p50 = scmp.eq.s32.totalorder %s12, 1
    %p51 = scmp.ne.s32.totalorder %s46, %s48
    %p52 = scmp.eq.s32.totalorder %s12, 0
    %p53 = por %p51, %p52
    %p54 = scmp.ne.s32.totalorder %s46, %s48
    %p55 = scmp.eq.s32.totalorder %s17, 1
    %p56 = por %p54, %p55
    %p57 = scmp.ne.s32.totalorder %s48, %s49
    %p58 = scmp.eq.s32.totalorder %s17, 0
    %p59 = por %p57, %p58
    %p60 = scmp.ne.s32.totalorder %s48, %s49
    %p61 = scmp.eq.s32.totalorder %s18, 1
    %p62 = por %p60, %p61
    %p64 = scmp.ne.s32.totalorder %s49, %s63
    %p65 = scmp.eq.s32.totalorder %s18, 0
    %p66 = por %p64, %p65
    %s68 = sadd.s32 %s67, 1
    %p71 = scmp.eq.s32.totalorder %s12, 1
    %p72 = scmp.ne.s32.totalorder %s67, %s69
    %p73 = scmp.eq.s32.totalorder %s12, 0
    %p74 = por %p72, %p73
    %p75 = scmp.ne.s32.totalorder %s67, %s69
    %p76 = scmp.eq.s32.totalorder %s17, 1
    %p77 = por %p75, %p76
    %p78 = scmp.ne.s32.totalorder %s69, %s70
    %p79 = scmp.eq.s32.totalorder %s17, 0
    %p80 = por %p78, %p79
    %p81 = scmp.ne.s32.totalorder %s69, %s70
    %p82 = scmp.eq.s32.totalorder %s18, 1
    %p83 = por %p81, %p82
    %p85 = scmp.ne.s32.totalorder %s70, %s84
    %p86 = scmp.eq.s32.totalorder %s18, 0
    %p87 = por %p85, %p86
    %s89 = sadd.s32 %s88, 1
    %p92 = scmp.eq.s32.totalorder %s12, 1
    %p93 = scmp.ne.s32.totalorder %s88, %s90
    %p94 = scmp.eq.s32.totalorder %s12, 0
    %p95 = por %p93, %p94
    %p96 = scmp.ne.s32.totalorder %s88, %s90
    %p97 = scmp.eq.s32.totalorder %s17, 1
    %p98 = por %p96, %p97
    %p99 = scmp.ne.s32.totalorder %s90, %s91
    %p100 = scmp.eq.s32.totalorder %s17, 0
    %p101 = por %p99, %p100
    %p102 = scmp.ne.s32.totalorder %s90, %s91
    %p103 = scmp.eq.s32.totalorder %s18, 1
    %p104 = por %p102, %p103
    %p106 = scmp.ne.s32.totalorder %s91, %s105
    %p107 = scmp.eq.s32.totalorder %s18, 0
    %p108 = por %p106, %p107
    %s110 = sadd.s32 %s109, 1
    %p113 = scmp.eq.s32.totalorder %s12, 1
    %p114 = scmp.ne.s32.totalorder %s109, %s111
    %p115 = scmp.eq.s32.totalorder %s12, 0
    %p116 = por %p114, %p115
    %p117 = scmp.ne.s32.totalorder %s109, %s111
    %p118 = scmp.eq.s32.totalorder %s17, 1
    %p119 = por %p117, %p118
    %p120 = scmp.ne.s32.totalorder %s111, %s112
    %p121 = scmp.eq.s32.totalorder %s17, 0
    %p122 = por %p120, %p121
    %p123 = scmp.ne.s32.totalorder %s111, %s112
    %p124 = scmp.eq.s32.totalorder %s18, 1
    %p125 = por %p123, %p124
    %p127 = scmp.ne.s32.totalorder %s112, %s126
    %p128 = scmp.eq.s32.totalorder %s18, 0
    %p129 = por %p127, %p128
    %s131 = sadd.s32 %s130, 1
    %p134 = scmp.eq.s32.totalorder %s12, 1
    %p135 = scmp.ne.s32.totalorder %s130, %s132
    %p136 = scmp.eq.s32.totalorder %s12, 0
    %p137 = por %p135, %p136
    %p138 = scmp.ne.s32.totalorder %s130, %s132
    %p139 = scmp.eq.s32.totalorder %s17, 1
    %p140 = por %p138, %p139
    %p141 = scmp.ne.s32.totalorder %s132, %s133
    %p142 = scmp.eq.s32.totalorder %s17, 0
    %p143 = por %p141, %p142
    %p144 = scmp.ne.s32.totalorder %s132, %s133
    %p145 = scmp.eq.s32.totalorder %s18, 1
    %p146 = por %p144, %p145
    %p148 = scmp.ne.s32.totalorder %s133, %s147
    %p149 = scmp.eq.s32.totalorder %s18, 0
    %p150 = por %p148, %p149
    %s151 = ssub.s32 %s12, %s19
    %p152 = scmp.eq.s32.totalorder %s151, 0
    %s154 = sadd.s32 %s153, 1
    %s155 = scalar_select %p152, %s153, %s154
    %p158 = pneg %p152
    %p159 = scmp.eq.s32.totalorder %s12, 1
    %p160 = por %p158, %p159
    %p161 = scmp.ne.s32.totalorder %s153, %s156
    %p162 = scmp.eq.s32.totalorder %s12, 0
    %p163 = por %p161, %p162
    %p164 = scmp.ne.s32.totalorder %s153, %s156
    %p165 = scmp.eq.s32.totalorder %s17, 1
    %p166 = por %p164, %p165
    %p167 = scmp.ne.s32.totalorder %s156, %s157
    %p168 = scmp.eq.s32.totalorder %s17, 0
    %p169 = por %p167, %p168
    %p170 = scmp.ne.s32.totalorder %s156, %s157
    %p171 = scmp.eq.s32.totalorder %s18, 1
    %p172 = por %p170, %p171
    %p174 = scmp.ne.s32.totalorder %s157, %s173
    %p175 = scmp.eq.s32.totalorder %s18, 0
    %p176 = por %p174, %p175
    %p177 = scmp.le.s32.totalorder 1, %s12
    %p178 = scmp.lt.s32.totalorder %s12, 3
    %p179 = pnand %p177, %p178
    %p180 = pneg %p179
    // Predicated region
    $region9: #{tpu_custom_call.1} parent=5 // pred_check
      _
    $region10: #{tpu_custom_call.1} parent=5 // pred_check_branch
      %182 = sbr.rel (%p179) target = $region12
    $region11: #{tpu_custom_call.1} parent=5 // pred_region
      %s183 = ssub.s32 %s12, 1
      // Predicated region
      $region13: #{tpu_custom_call.1} parent=11 // pred_check
        %p184 = pneg %p59
      $region14: #{tpu_custom_call.1} parent=11 // pred_check_branch
        %186 = sbr.rel (%p184) target = $region16
      $region15: #{tpu_custom_call.1} parent=11 // pred_region
        _
      $region16: #{tpu_custom_call.1} parent=11 // pred_fallthru
        _
      // Predicated region
      $region17: #{tpu_custom_call.1} parent=11 // pred_check
        %p187 = pneg %p80
      $region18: #{tpu_custom_call.1} parent=11 // pred_check_branch
        %189 = sbr.rel (%p187) target = $region20
      $region19: #{tpu_custom_call.1} parent=11 // pred_region
        _
      $region20: #{tpu_custom_call.1} parent=11 // pred_fallthru
        _
      // Predicated region
      $region21: #{tpu_custom_call.1} parent=11 // pred_check
        %p190 = pneg %p101
      $region22: #{tpu_custom_call.1} parent=11 // pred_check_branch
        %192 = sbr.rel (%p190) target = $region24
      $region23: #{tpu_custom_call.1} parent=11 // pred_region
        _
      $region24: #{tpu_custom_call.1} parent=11 // pred_fallthru
        _
      // Predicated region
      $region25: #{tpu_custom_call.1} parent=11 // pred_check
        %p193 = pneg %p122
      $region26: #{tpu_custom_call.1} parent=11 // pred_check_branch
        %195 = sbr.rel (%p193) target = $region28
      $region27: #{tpu_custom_call.1} parent=11 // pred_region
        _
      $region28: #{tpu_custom_call.1} parent=11 // pred_fallthru
        _
      // Predicated region
      $region29: #{tpu_custom_call.1} parent=11 // pred_check
        %p196 = pneg %p143
      $region30: #{tpu_custom_call.1} parent=11 // pred_check_branch
        %198 = sbr.rel (%p196) target = $region32
      $region31: #{tpu_custom_call.1} parent=11 // pred_region
        _
      $region32: #{tpu_custom_call.1} parent=11 // pred_fallthru
        _
    $region12: #{tpu_custom_call.1} parent=5 // pred_fallthru
      _
    %p199 = scmp.lt.s32.totalorder %s12, 2
    // Predicated region
    $region33: #{tpu_custom_call.1} parent=5 // pred_check
      %p200 = pneg %p199
    $region34: #{tpu_custom_call.1} parent=5 // pred_check_branch
      %202 = sbr.rel (%p200) target = $region36
    $region35: #{tpu_custom_call.1} parent=5 // pred_region
      // Predicated region
      $region37: #{tpu_custom_call.1} parent=35 // pred_check
        %p203 = pneg %p32
      $region38: #{tpu_custom_call.1} parent=35 // pred_check_branch
        %205 = sbr.rel (%p203) target = $region40
      $region39: #{tpu_custom_call.1} parent=35 // pred_region
        %p206 = scmp.lt.s32.totalorder %s12, 1
        %s207 = scalar_select %p206, %s12, 1
        %s208 = smul.addr %s207, 32
        %s209 = smul.addr %s208, 8
        %s210 = scalar_lea.vmem %s0, %s209
      $region40: #{tpu_custom_call.1} parent=35 // pred_fallthru
        _
    $region36: #{tpu_custom_call.1} parent=5 // pred_fallthru
      _
    %p211 = scmp.le.s32.totalorder 1, %s12
    %p212 = scmp.lt.s32.totalorder %s12, 3
    %p213 = pnand %p211, %p212
    %p214 = pneg %p213
    // Predicated region
    $region41: #{tpu_custom_call.1} parent=5 // pred_check
      _
    $region42: #{tpu_custom_call.1} parent=5 // pred_check_branch
      %216 = sbr.rel (%p213) target = $region44
    $region43: #{tpu_custom_call.1} parent=5 // pred_region
      %s217 = ssub.s32 %s12, 1
      %p218 = scmp.lt.s32.totalorder %s17, 1
      %s219 = scalar_select %p218, %s17, 1
      %s220 = smul.addr %s219, 32
      %s221 = smul.addr %s220, 8
      %s222 = scalar_lea.vmem %s0, %s221
      %p223 = pneg %p38
      %p224 = pneg %p35
      %p225 = pneg %p59
      %p226 = pneg %p56
      %p227 = pneg %p80
      %p228 = pneg %p77
      %p229 = pneg %p101
      %p230 = pneg %p98
      %p231 = pneg %p122
      %p232 = pneg %p119
      %p233 = pneg %p143
      %p234 = pneg %p140
      %p235 = pneg %p169
      %p236 = pneg %p166
      %p237 = scmp.lt.s32.totalorder %s17, 1
      %s238 = scalar_select %p237, %s17, 1
      %s239 = smul.addr %s238, 32
      %s240 = smul.addr %s239, 8
      %s241 = scalar_lea.vmem %s6, %s240
      %p242 = scmp.lt.s32.totalorder %s17, 1
      %s243 = scalar_select %p242, %s17, 1
      %s244 = smul.addr %s243, 32
      %s245 = smul.addr %s244, 8
      %s246 = scalar_lea.vmem %s0, %s245
      %p247 = scmp.lt.s32.totalorder %s17, 1
      %s248 = scalar_select %p247, %s17, 1
      %s249 = smul.addr %s248, 32
      %s250 = smul.addr %s249, 8
      %s251 = scalar_lea.vmem %s6, %s250
      %253 = vst [vmem:[#allocation2] sm:$0xff] 0.0
      %254 = vst [vmem:[#allocation2 + $0x20] sm:$0xff] 0.0
      %255 = vst [vmem:[#allocation2 + $0x40] sm:$0xff] 0.0
      %256 = vst [vmem:[#allocation2 + $0x60] sm:$0xff] 0.0
      %257 = vst [vmem:[#allocation2 + $0x80] sm:$0xff] 0.0
      %258 = vst [vmem:[#allocation2 + $0xa0] sm:$0xff] 0.0
      %259 = vst [vmem:[#allocation2 + $0xc0] sm:$0xff] 0.0
      %260 = vst [vmem:[#allocation2 + $0xe0] sm:$0xff] 0.0
      %261 = vst [vmem:[#allocation2 + $0x100] sm:$0xff] 0.0
      %262 = vst [vmem:[#allocation2 + $0x120] sm:$0xff] 0.0
      %263 = vst [vmem:[#allocation2 + $0x140] sm:$0xff] 0.0
      %264 = vst [vmem:[#allocation2 + $0x160] sm:$0xff] 0.0
      %265 = vst [vmem:[#allocation2 + $0x180] sm:$0xff] 0.0
      %266 = vst [vmem:[#allocation2 + $0x1a0] sm:$0xff] 0.0
      %267 = vst [vmem:[#allocation2 + $0x1c0] sm:$0xff] 0.0
      %268 = vst [vmem:[#allocation2 + $0x1e0] sm:$0xff] 0.0
      %269 = vst [vmem:[#allocation2 + $0x200] sm:$0xff] 0.0
      %270 = vst [vmem:[#allocation2 + $0x220] sm:$0xff] 0.0
      %271 = vst [vmem:[#allocation2 + $0x18] sm:$0xff] 0.0
      %272 = vst [vmem:[#allocation2 + $0x38] sm:$0xff] 0.0
      %273 = vst [vmem:[#allocation2 + $0x58] sm:$0xff] 0.0
      %274 = vst [vmem:[#allocation2 + $0x78] sm:$0xff] 0.0
      %275 = vst [vmem:[#allocation2 + $0x98] sm:$0xff] 0.0
      %276 = vst [vmem:[#allocation2 + $0xb8] sm:$0xff] 0.0
      %277 = vst [vmem:[#allocation2 + $0xd8] sm:$0xff] 0.0
      %278 = vst [vmem:[#allocation2 + $0xf8] sm:$0xff] 0.0
      %279 = vst [vmem:[#allocation2 + $0x118] sm:$0xff] 0.0
      %280 = vst [vmem:[#allocation2 + $0x138] sm:$0xff] 0.0
      %281 = vst [vmem:[#allocation2 + $0x158] sm:$0xff] 0.0
      %282 = vst [vmem:[#allocation2 + $0x178] sm:$0xff] 0.0
      %283 = vst [vmem:[#allocation2 + $0x198] sm:$0xff] 0.0
      %284 = vst [vmem:[#allocation2 + $0x1b8] sm:$0xff] 0.0
      %285 = vst [vmem:[#allocation2 + $0x1d8] sm:$0xff] 0.0
      %286 = vst [vmem:[#allocation2 + $0x1f8] sm:$0xff] 0.0
      %287 = vst [vmem:[#allocation2 + $0x218] sm:$0xff] 0.0
      %288 = vst [vmem:[#allocation2 + $0x238] sm:$0xff] 0.0
      %289 = vst [vmem:[#allocation2 + $0x8] sm:$0xff] 0.0
      %290 = vst [vmem:[#allocation2 + $0x10] sm:$0xff] 0.0
      %s291 = scalar_lea.vmem [#allocation2], 544
      %292 = vst [vmem:[%s291 + $0x8] sm:$0xff] 0.0
      %293 = vst [vmem:[%s291 + $0x10] sm:$0xff] 0.0
      %v294 = vld [vmem:[%s4] sm:$0x1]
      %v295 = vld [vmem:[%s4 + $0x1] sm:$0x1]
      %v296 = vld [vmem:[%s4 + $0x2] sm:$0x1]
      %v297 = vld [vmem:[%s4 + $0x3] sm:$0x1]
      %v298 = vld [vmem:[%s5] sm:$0x1]
      %v299 = vld [vmem:[%s5 + $0x1] sm:$0x1]
      %v300 = vld [vmem:[%s246] sm:$0xff]
      %v301 = vld [vmem:[%s246 + $0x8] sm:$0xff]
      %v302 = vld [vmem:[%s246 + $0x10] sm:$0xff]
      %v303 = vld [vmem:[%s246 + $0x18] sm:$0xff]
      %v304 = vld [vmem:[%s246 + $0x20] sm:$0xff]
      %v305 = vld [vmem:[%s246 + $0x28] sm:$0xff]
      %v306 = vld [vmem:[%s246 + $0x30] sm:$0xff]
      %v307 = vld [vmem:[%s246 + $0x38] sm:$0xff]
      %v308 = vld [vmem:[%s246 + $0x40] sm:$0xff]
      %v309 = vld [vmem:[%s246 + $0x48] sm:$0xff]
      %v310 = vld [vmem:[%s246 + $0x50] sm:$0xff]
      %v311 = vld [vmem:[%s246 + $0x58] sm:$0xff]
      %v312 = vld [vmem:[%s246 + $0x60] sm:$0xff]
      %v313 = vld [vmem:[%s246 + $0x68] sm:$0xff]
      %v314 = vld [vmem:[%s246 + $0x70] sm:$0xff]
      %v315 = vld [vmem:[%s246 + $0x78] sm:$0xff]
      %v316 = vld [vmem:[%s246 + $0x80] sm:$0xff]
      %v317 = vld [vmem:[%s246 + $0x88] sm:$0xff]
      %v318 = vld [vmem:[%s246 + $0x90] sm:$0xff]
      %v319 = vld [vmem:[%s246 + $0x98] sm:$0xff]
      %v320 = vld [vmem:[%s246 + $0xa0] sm:$0xff]
      %v321 = vld [vmem:[%s246 + $0xa8] sm:$0xff]
      %v322 = vld [vmem:[%s246 + $0xb0] sm:$0xff]
      %v323 = vld [vmem:[%s246 + $0xb8] sm:$0xff]
      %v324 = vld [vmem:[%s246 + $0xc0] sm:$0xff]
      %v325 = vld [vmem:[%s246 + $0xc8] sm:$0xff]
      %v326 = vld [vmem:[%s246 + $0xd0] sm:$0xff]
      %v327 = vld [vmem:[%s246 + $0xd8] sm:$0xff]
      %v328 = vld [vmem:[%s246 + $0xe0] sm:$0xff]
      %v329 = vld [vmem:[%s246 + $0xe8] sm:$0xff]
      %v330 = vld [vmem:[%s246 + $0xf0] sm:$0xff]
      %v331 = vld [vmem:[%s246 + $0xf8] sm:$0xff]
      %v332 = vpack.c.bf16 %v301, %v300
      %v333 = vpack.c.bf16 %v303, %v302
      %v334 = vpack.c.bf16 %v305, %v304
      %v335 = vpack.c.bf16 %v307, %v306
      %v336 = vpack.c.bf16 %v309, %v308
      %v337 = vpack.c.bf16 %v311, %v310
      %v338 = vpack.c.bf16 %v313, %v312
      %v339 = vpack.c.bf16 %v315, %v314
      %v340 = vpack.c.bf16 %v317, %v316
      %v341 = vpack.c.bf16 %v319, %v318
      %v342 = vpack.c.bf16 %v321, %v320
      %v343 = vpack.c.bf16 %v323, %v322
      %v344 = vpack.c.bf16 %v325, %v324
      %v345 = vpack.c.bf16 %v327, %v326
      %v346 = vpack.c.bf16 %v329, %v328
      %v347 = vpack.c.bf16 %v331, %v330
      %v348 = vld [vmem:[%s1] sm:$0xf]
      %350 = vst [vmem:[#allocation1] ss:$4 sm:$0xff] %v348
      %v351 = vld.sshfl [vmem:[#allocation1] sm:$0xff pattern:$0x73625140]
      %v352 = vld.sshfl [vmem:[#allocation1 + $0x8] sm:$0xff pattern:$0x73625140]
      %vm353 = vcmask 31744
      %v355 = vsel %vm353, %v332, 0
      %v358 = vsel %vm353, %v333, 0
      %v361 = vsel %vm353, %v334, 0
      %v364 = vsel %vm353, %v335, 0
      %v367 = vsel %vm353, %v336, 0
      %v370 = vsel %vm353, %v337, 0
      %v373 = vsel %vm353, %v338, 0
      %v376 = vsel %vm353, %v339, 0
      %v379 = vsel %vm353, %v340, 0
      %v382 = vsel %vm353, %v341, 0
      %v385 = vsel %vm353, %v342, 0
      %v388 = vsel %vm353, %v343, 0
      %v391 = vsel %vm353, %v344, 0
      %v394 = vsel %vm353, %v345, 0
      %v397 = vsel %vm353, %v346, 0
      %v400 = vsel %vm353, %v347, 0
      %vm402 = vcmask 1041408
      %v403 = vsel %vm402, %v351, 0
      %v405 = vsel %vm402, %v352, 0
      %407 = vmatpush.bf16.msra.mxu0 0
      %408 = vmatpush.bf16.msra.mxu0 0
      %409 = vmatpush.bf16.msra.mxu0 0
      %410 = vmatpush.bf16.msra.mxu0 0
      %411 = vmatpush.bf16.msra.mxu0 0
      %412 = vmatpush.bf16.msra.mxu0 0
      %413 = vmatpush.bf16.msra.mxu0 0
      %414 = vmatpush.bf16.msra.mxu0 %v403
      %415 = vmatmul.bf16.gmra.mxu0 %v355
      %v416 = vpop.f32.mrf.mxu0
      %v417 = vadd.f32 0.0, %v416
      %v418 = vpop.f32.mrf.mxu0
      %v419 = vadd.f32 0.0, %v418
      %420 = vmatmul.bf16.gmra.mxu0 %v358
      %v421 = vpop.f32.mrf.mxu0
      %v422 = vadd.f32 0.0, %v421
      %v423 = vpop.f32.mrf.mxu0
      %v424 = vadd.f32 0.0, %v423
      %425 = vmatmul.bf16.gmra.mxu0 %v361
      %v426 = vpop.f32.mrf.mxu0
      %v427 = vadd.f32 0.0, %v426
      %v428 = vpop.f32.mrf.mxu0
      %v429 = vadd.f32 0.0, %v428
      %430 = vmatmul.bf16.gmra.mxu0 %v364
      %v431 = vpop.f32.mrf.mxu0
      %v432 = vadd.f32 0.0, %v431
      %v433 = vpop.f32.mrf.mxu0
      %v434 = vadd.f32 0.0, %v433
      %435 = vmatmul.bf16.gmra.mxu0 %v367
      %v436 = vpop.f32.mrf.mxu0
      %v437 = vadd.f32 0.0, %v436
      %v438 = vpop.f32.mrf.mxu0
      %v439 = vadd.f32 0.0, %v438
      %440 = vmatmul.bf16.gmra.mxu0 %v370
      %v441 = vpop.f32.mrf.mxu0
      %v442 = vadd.f32 0.0, %v441
      %v443 = vpop.f32.mrf.mxu0
      %v444 = vadd.f32 0.0, %v443
      %445 = vmatmul.bf16.gmra.mxu0 %v373
      %v446 = vpop.f32.mrf.mxu0
      %v447 = vadd.f32 0.0, %v446
      %v448 = vpop.f32.mrf.mxu0
      %v449 = vadd.f32 0.0, %v448
      %450 = vmatmul.bf16.gmra.mxu0 %v376
      %v451 = vpop.f32.mrf.mxu0
      %v452 = vadd.f32 0.0, %v451
      %v453 = vpop.f32.mrf.mxu0
      %v454 = vadd.f32 0.0, %v453
      %455 = vmatmul.bf16.gmra.mxu0 %v379
      %v456 = vpop.f32.mrf.mxu0
      %v457 = vadd.f32 0.0, %v456
      %v458 = vpop.f32.mrf.mxu0
      %v459 = vadd.f32 0.0, %v458
      %460 = vmatmul.bf16.gmra.mxu0 %v382
      %v461 = vpop.f32.mrf.mxu0
      %v462 = vadd.f32 0.0, %v461
      %v463 = vpop.f32.mrf.mxu0
      %v464 = vadd.f32 0.0, %v463
      %465 = vmatmul.bf16.gmra.mxu0 %v385
      %v466 = vpop.f32.mrf.mxu0
      %v467 = vadd.f32 0.0, %v466
      %v468 = vpop.f32.mrf.mxu0
      %v469 = vadd.f32 0.0, %v468
      %470 = vmatmul.bf16.gmra.mxu0 %v388
      %v471 = vpop.f32.mrf.mxu0
      %v472 = vadd.f32 0.0, %v471
      %v473 = vpop.f32.mrf.mxu0
      %v474 = vadd.f32 0.0, %v473
      %475 = vmatmul.bf16.gmra.mxu0 %v391
      %v476 = vpop.f32.mrf.mxu0
      %v477 = vadd.f32 0.0, %v476
      %v478 = vpop.f32.mrf.mxu0
      %v479 = vadd.f32 0.0, %v478
      %480 = vmatmul.bf16.gmra.mxu0 %v394
      %v481 = vpop.f32.mrf.mxu0
      %v482 = vadd.f32 0.0, %v481
      %v483 = vpop.f32.mrf.mxu0
      %v484 = vadd.f32 0.0, %v483
      %485 = vmatmul.bf16.gmra.mxu0 %v397
      %v486 = vpop.f32.mrf.mxu0
      %v487 = vadd.f32 0.0, %v486
      %v488 = vpop.f32.mrf.mxu0
      %v489 = vadd.f32 0.0, %v488
      %490 = vmatmul.bf16.gmra.mxu0 %v400
      %v491 = vpop.f32.mrf.mxu0
      %v492 = vadd.f32 0.0, %v491
      %v493 = vpop.f32.mrf.mxu0
      %v494 = vadd.f32 0.0, %v493
      %495 = vdwg.mxu0
      %496 = vmatpush.bf16.msra.mxu0 0
      %497 = vmatpush.bf16.msra.mxu0 0
      %498 = vmatpush.bf16.msra.mxu0 0
      %499 = vmatpush.bf16.msra.mxu0 0
      %500 = vmatpush.bf16.msra.mxu0 0
      %501 = vmatpush.bf16.msra.mxu0 0
      %502 = vmatpush.bf16.msra.mxu0 0
      %503 = vmatpush.bf16.msra.mxu0 %v405
      %504 = vmatmul.bf16.gmra.mxu0 %v355
      %v505 = vpop.f32.mrf.mxu0
      %v506 = vadd.f32 0.0, %v505
      %v507 = vpop.f32.mrf.mxu0
      %v508 = vadd.f32 0.0, %v507
      %509 = vmatmul.bf16.gmra.mxu0 %v358
      %v510 = vpop.f32.mrf.mxu0
      %v511 = vadd.f32 0.0, %v510
      %v512 = vpop.f32.mrf.mxu0
      %v513 = vadd.f32 0.0, %v512
      %514 = vmatmul.bf16.gmra.mxu0 %v361
      %v515 = vpop.f32.mrf.mxu0
      %v516 = vadd.f32 0.0, %v515
      %v517 = vpop.f32.mrf.mxu0
      %v518 = vadd.f32 0.0, %v517
      %519 = vmatmul.bf16.gmra.mxu0 %v364
      %v520 = vpop.f32.mrf.mxu0
      %v521 = vadd.f32 0.0, %v520
      %v522 = vpop.f32.mrf.mxu0
      %v523 = vadd.f32 0.0, %v522
      %524 = vmatmul.bf16.gmra.mxu0 %v367
      %v525 = vpop.f32.mrf.mxu0
      %v526 = vadd.f32 0.0, %v525
      %v527 = vpop.f32.mrf.mxu0
      %v528 = vadd.f32 0.0, %v527
      %529 = vmatmul.bf16.gmra.mxu0 %v370
      %v530 = vpop.f32.mrf.mxu0
      %v531 = vadd.f32 0.0, %v530
      %v532 = vpop.f32.mrf.mxu0
      %v533 = vadd.f32 0.0, %v532
      %534 = vmatmul.bf16.gmra.mxu0 %v373
      %v535 = vpop.f32.mrf.mxu0
      %v536 = vadd.f32 0.0, %v535
      %v537 = vpop.f32.mrf.mxu0
      %v538 = vadd.f32 0.0, %v537
      %539 = vmatmul.bf16.gmra.mxu0 %v376
      %v540 = vpop.f32.mrf.mxu0
      %v541 = vadd.f32 0.0, %v540
      %v542 = vpop.f32.mrf.mxu0
      %v543 = vadd.f32 0.0, %v542
      %544 = vmatmul.bf16.gmra.mxu0 %v379
      %v545 = vpop.f32.mrf.mxu0
      %v546 = vadd.f32 0.0, %v545
      %v547 = vpop.f32.mrf.mxu0
      %v548 = vadd.f32 0.0, %v547
      %549 = vmatmul.bf16.gmra.mxu0 %v382
      %v550 = vpop.f32.mrf.mxu0
      %v551 = vadd.f32 0.0, %v550
      %v552 = vpop.f32.mrf.mxu0
      %v553 = vadd.f32 0.0, %v552
      %554 = vmatmul.bf16.gmra.mxu0 %v385
      %v555 = vpop.f32.mrf.mxu0
      %v556 = vadd.f32 0.0, %v555
      %v557 = vpop.f32.mrf.mxu0
      %v558 = vadd.f32 0.0, %v557
      %559 = vmatmul.bf16.gmra.mxu0 %v388
      %v560 = vpop.f32.mrf.mxu0
      %v561 = vadd.f32 0.0, %v560
      %v562 = vpop.f32.mrf.mxu0
      %v563 = vadd.f32 0.0, %v562
      %564 = vmatmul.bf16.gmra.mxu0 %v391
      %v565 = vpop.f32.mrf.mxu0
      %v566 = vadd.f32 0.0, %v565
      %v567 = vpop.f32.mrf.mxu0
      %v568 = vadd.f32 0.0, %v567
      %569 = vmatmul.bf16.gmra.mxu0 %v394
      %v570 = vpop.f32.mrf.mxu0
      %v571 = vadd.f32 0.0, %v570
      %v572 = vpop.f32.mrf.mxu0
      %v573 = vadd.f32 0.0, %v572
      %574 = vmatmul.bf16.gmra.mxu0 %v397
      %v575 = vpop.f32.mrf.mxu0
      %v576 = vadd.f32 0.0, %v575
      %v577 = vpop.f32.mrf.mxu0
      %v578 = vadd.f32 0.0, %v577
      %579 = vmatmul.bf16.gmra.mxu0 %v400
      %v580 = vpop.f32.mrf.mxu0
      %v581 = vadd.f32 0.0, %v580
      %v582 = vpop.f32.mrf.mxu0
      %v583 = vadd.f32 0.0, %v582
      %584 = vdwg.mxu0
      %v585 = vld [vmem:[%s5 + $0x2] sm:$0x1]
      %v586 = vld [vmem:[%s5 + $0x3] sm:$0x1]
      %v587 = vperm.slane %v585, 0
      %v588 = vmul.f32 %v506, %v587
      %v589 = vmul.f32 %v508, %v587
      %v590 = vmul.f32 %v511, %v587
      %v591 = vmul.f32 %v513, %v587
      %v592 = vmul.f32 %v516, %v587
      %v593 = vmul.f32 %v518, %v587
      %v594 = vmul.f32 %v521, %v587
      %v595 = vmul.f32 %v523, %v587
      %v596 = vmul.f32 %v526, %v587
      %v597 = vmul.f32 %v528, %v587
      %v598 = vmul.f32 %v531, %v587
      %v599 = vmul.f32 %v533, %v587
      %v600 = vmul.f32 %v536, %v587
      %v601 = vmul.f32 %v538, %v587
      %v602 = vmul.f32 %v541, %v587
      %v603 = vmul.f32 %v543, %v587
      %v604 = vmul.f32 %v546, %v587
      %v605 = vmul.f32 %v548, %v587
      %v606 = vmul.f32 %v551, %v587
      %v607 = vmul.f32 %v553, %v587
      %v608 = vmul.f32 %v556, %v587
      %v609 = vmul.f32 %v558, %v587
      %v610 = vmul.f32 %v561, %v587
      %v611 = vmul.f32 %v563, %v587
      %v612 = vmul.f32 %v566, %v587
      %v613 = vmul.f32 %v568, %v587
      %v614 = vmul.f32 %v571, %v587
      %v615 = vmul.f32 %v573, %v587
      %v616 = vmul.f32 %v576, %v587
      %v617 = vmul.f32 %v578, %v587
      %v618 = vmul.f32 %v581, %v587
      %v619 = vmul.f32 %v583, %v587
      %v620 = vperm.slane %v586, 0
      %v621 = vadd.f32 %v588, %v620
      %v622 = vadd.f32 %v589, %v620
      %v623 = vadd.f32 %v590, %v620
      %v624 = vadd.f32 %v591, %v620
      %v625 = vadd.f32 %v592, %v620
      %v626 = vadd.f32 %v593, %v620
      %v627 = vadd.f32 %v594, %v620
      %v628 = vadd.f32 %v595, %v620
      %v629 = vadd.f32 %v596, %v620
      %v630 = vadd.f32 %v597, %v620
      %v631 = vadd.f32 %v598, %v620
      %v632 = vadd.f32 %v599, %v620
      %v633 = vadd.f32 %v600, %v620
      %v634 = vadd.f32 %v601, %v620
      %v635 = vadd.f32 %v602, %v620
      %v636 = vadd.f32 %v603, %v620
      %v637 = vadd.f32 %v604, %v620
      %v638 = vadd.f32 %v605, %v620
      %v639 = vadd.f32 %v606, %v620
      %v640 = vadd.f32 %v607, %v620
      %v641 = vadd.f32 %v608, %v620
      %v642 = vadd.f32 %v609, %v620
      %v643 = vadd.f32 %v610, %v620
      %v644 = vadd.f32 %v611, %v620
      %v645 = vadd.f32 %v612, %v620
      %v646 = vadd.f32 %v613, %v620
      %v647 = vadd.f32 %v614, %v620
      %v648 = vadd.f32 %v615, %v620
      %v649 = vadd.f32 %v616, %v620
      %v650 = vadd.f32 %v617, %v620
      %v651 = vadd.f32 %v618, %v620
      %v652 = vadd.f32 %v619, %v620
      %vm653 = vcmask 64512
      %654 = vst.msk [vmem:[%s251] sm:$0xff] %vm653, %v621
      %655 = vst.msk [vmem:[%s251 + $0x8] sm:$0xff] %vm653, %v622
      %656 = vst.msk [vmem:[%s251 + $0x10] sm:$0xff] %vm653, %v623
      %657 = vst.msk [vmem:[%s251 + $0x18] sm:$0xff] %vm653, %v624
      %658 = vst.msk [vmem:[%s251 + $0x20] sm:$0xff] %vm653, %v625
      %659 = vst.msk [vmem:[%s251 + $0x28] sm:$0xff] %vm653, %v626
      %660 = vst.msk [vmem:[%s251 + $0x30] sm:$0xff] %vm653, %v627
      %661 = vst.msk [vmem:[%s251 + $0x38] sm:$0xff] %vm653, %v628
      %662 = vst.msk [vmem:[%s251 + $0x40] sm:$0xff] %vm653, %v629
      %663 = vst.msk [vmem:[%s251 + $0x48] sm:$0xff] %vm653, %v630
      %664 = vst.msk [vmem:[%s251 + $0x50] sm:$0xff] %vm653, %v631
      %665 = vst.msk [vmem:[%s251 + $0x58] sm:$0xff] %vm653, %v632
      %666 = vst.msk [vmem:[%s251 + $0x60] sm:$0xff] %vm653, %v633
      %667 = vst.msk [vmem:[%s251 + $0x68] sm:$0xff] %vm653, %v634
      %668 = vst.msk [vmem:[%s251 + $0x70] sm:$0xff] %vm653, %v635
      %669 = vst.msk [vmem:[%s251 + $0x78] sm:$0xff] %vm653, %v636
      %670 = vst.msk [vmem:[%s251 + $0x80] sm:$0xff] %vm653, %v637
      %671 = vst.msk [vmem:[%s251 + $0x88] sm:$0xff] %vm653, %v638
      %672 = vst.msk [vmem:[%s251 + $0x90] sm:$0xff] %vm653, %v639
      %673 = vst.msk [vmem:[%s251 + $0x98] sm:$0xff] %vm653, %v640
      %674 = vst.msk [vmem:[%s251 + $0xa0] sm:$0xff] %vm653, %v641
      %675 = vst.msk [vmem:[%s251 + $0xa8] sm:$0xff] %vm653, %v642
      %676 = vst.msk [vmem:[%s251 + $0xb0] sm:$0xff] %vm653, %v643
      %677 = vst.msk [vmem:[%s251 + $0xb8] sm:$0xff] %vm653, %v644
      %678 = vst.msk [vmem:[%s251 + $0xc0] sm:$0xff] %vm653, %v645
      %679 = vst.msk [vmem:[%s251 + $0xc8] sm:$0xff] %vm653, %v646
      %680 = vst.msk [vmem:[%s251 + $0xd0] sm:$0xff] %vm653, %v647
      %681 = vst.msk [vmem:[%s251 + $0xd8] sm:$0xff] %vm653, %v648
      %682 = vst.msk [vmem:[%s251 + $0xe0] sm:$0xff] %vm653, %v649
      %683 = vst.msk [vmem:[%s251 + $0xe8] sm:$0xff] %vm653, %v650
      %684 = vst.msk [vmem:[%s251 + $0xf0] sm:$0xff] %vm653, %v651
      %685 = vst.msk [vmem:[%s251 + $0xf8] sm:$0xff] %vm653, %v652
      %v686 = vperm.slane %v294, 0
      %v687 = vmul.f32 %v417, %v686
      %v688 = vmul.f32 %v419, %v686
      %v689 = vmul.f32 %v422, %v686
      %v690 = vmul.f32 %v424, %v686
      %v691 = vmul.f32 %v427, %v686
      %v692 = vmul.f32 %v429, %v686
      %v693 = vmul.f32 %v432, %v686
      %v694 = vmul.f32 %v434, %v686
      %v695 = vmul.f32 %v437, %v686
      %v696 = vmul.f32 %v439, %v686
      %v697 = vmul.f32 %v442, %v686
      %v698 = vmul.f32 %v444, %v686
      %v699 = vmul.f32 %v447, %v686
      %v700 = vmul.f32 %v449, %v686
      %v701 = vmul.f32 %v452, %v686
      %v702 = vmul.f32 %v454, %v686
      %v703 = vmul.f32 %v457, %v686
      %v704 = vmul.f32 %v459, %v686
      %v705 = vmul.f32 %v462, %v686
      %v706 = vmul.f32 %v464, %v686
      %v707 = vmul.f32 %v467, %v686
      %v708 = vmul.f32 %v469, %v686
      %v709 = vmul.f32 %v472, %v686
      %v710 = vmul.f32 %v474, %v686
      %v711 = vmul.f32 %v477, %v686
      %v712 = vmul.f32 %v479, %v686
      %v713 = vmul.f32 %v482, %v686
      %v714 = vmul.f32 %v484, %v686
      %v715 = vmul.f32 %v487, %v686
      %v716 = vmul.f32 %v489, %v686
      %v717 = vmul.f32 %v492, %v686
      %v718 = vmul.f32 %v494, %v686
      %v719 = vperm.slane %v295, 0
      %v720 = vadd.f32 %v687, %v719
      %v721 = vadd.f32 %v688, %v719
      %v722 = vadd.f32 %v689, %v719
      %v723 = vadd.f32 %v690, %v719
      %v724 = vadd.f32 %v691, %v719
      %v725 = vadd.f32 %v692, %v719
      %v726 = vadd.f32 %v693, %v719
      %v727 = vadd.f32 %v694, %v719
      %v728 = vadd.f32 %v695, %v719
      %v729 = vadd.f32 %v696, %v719
      %v730 = vadd.f32 %v697, %v719
      %v731 = vadd.f32 %v698, %v719
      %v732 = vadd.f32 %v699, %v719
      %v733 = vadd.f32 %v700, %v719
      %v734 = vadd.f32 %v701, %v719
      %v735 = vadd.f32 %v702, %v719
      %v736 = vadd.f32 %v703, %v719
      %v737 = vadd.f32 %v704, %v719
      %v738 = vadd.f32 %v705, %v719
      %v739 = vadd.f32 %v706, %v719
      %v740 = vadd.f32 %v707, %v719
      %v741 = vadd.f32 %v708, %v719
      %v742 = vadd.f32 %v709, %v719
      %v743 = vadd.f32 %v710, %v719
      %v744 = vadd.f32 %v711, %v719
      %v745 = vadd.f32 %v712, %v719
      %v746 = vadd.f32 %v713, %v719
      %v747 = vadd.f32 %v714, %v719
      %v748 = vadd.f32 %v715, %v719
      %v749 = vadd.f32 %v716, %v719
      %v750 = vadd.f32 %v717, %v719
      %v751 = vadd.f32 %v718, %v719
      %v752 = vmax.f32 %v720, 0.0
      %v753 = vmax.f32 %v721, 0.0
      %v754 = vmax.f32 %v722, 0.0
      %v755 = vmax.f32 %v723, 0.0
      %v756 = vmax.f32 %v724, 0.0
      %v757 = vmax.f32 %v725, 0.0
      %v758 = vmax.f32 %v726, 0.0
      %v759 = vmax.f32 %v727, 0.0
      %v760 = vmax.f32 %v728, 0.0
      %v761 = vmax.f32 %v729, 0.0
      %v762 = vmax.f32 %v730, 0.0
      %v763 = vmax.f32 %v731, 0.0
      %v764 = vmax.f32 %v732, 0.0
      %v765 = vmax.f32 %v733, 0.0
      %v766 = vmax.f32 %v734, 0.0
      %v767 = vmax.f32 %v735, 0.0
      %v768 = vmax.f32 %v736, 0.0
      %v769 = vmax.f32 %v737, 0.0
      %v770 = vmax.f32 %v738, 0.0
      %v771 = vmax.f32 %v739, 0.0
      %v772 = vmax.f32 %v740, 0.0
      %v773 = vmax.f32 %v741, 0.0
      %v774 = vmax.f32 %v742, 0.0
      %v775 = vmax.f32 %v743, 0.0
      %v776 = vmax.f32 %v744, 0.0
      %v777 = vmax.f32 %v745, 0.0
      %v778 = vmax.f32 %v746, 0.0
      %v779 = vmax.f32 %v747, 0.0
      %v780 = vmax.f32 %v748, 0.0
      %v781 = vmax.f32 %v749, 0.0
      %v782 = vmax.f32 %v750, 0.0
      %v783 = vmax.f32 %v751, 0.0
      %v784 = vmin.f32 %v752, 6.0
      %v785 = vmin.f32 %v753, 6.0
      %v786 = vmin.f32 %v754, 6.0
      %v787 = vmin.f32 %v755, 6.0
      %v788 = vmin.f32 %v756, 6.0
      %v789 = vmin.f32 %v757, 6.0
      %v790 = vmin.f32 %v758, 6.0
      %v791 = vmin.f32 %v759, 6.0
      %v792 = vmin.f32 %v760, 6.0
      %v793 = vmin.f32 %v761, 6.0
      %v794 = vmin.f32 %v762, 6.0
      %v795 = vmin.f32 %v763, 6.0
      %v796 = vmin.f32 %v764, 6.0
      %v797 = vmin.f32 %v765, 6.0
      %v798 = vmin.f32 %v766, 6.0
      %v799 = vmin.f32 %v767, 6.0
      %v800 = vmin.f32 %v768, 6.0
      %v801 = vmin.f32 %v769, 6.0
      %v802 = vmin.f32 %v770, 6.0
      %v803 = vmin.f32 %v771, 6.0
      %v804 = vmin.f32 %v772, 6.0
      %v805 = vmin.f32 %v773, 6.0
      %v806 = vmin.f32 %v774, 6.0
      %v807 = vmin.f32 %v775, 6.0
      %v808 = vmin.f32 %v776, 6.0
      %v809 = vmin.f32 %v777, 6.0
      %v810 = vmin.f32 %v778, 6.0
      %v811 = vmin.f32 %v779, 6.0
      %v812 = vmin.f32 %v780, 6.0
      %v813 = vmin.f32 %v781, 6.0
      %v814 = vmin.f32 %v782, 6.0
      %v815 = vmin.f32 %v783, 6.0
      %s816 = scalar_lea.vmem [#allocation2], 32
      %817 = vst [vmem:[%s816 + $0x8] sm:$0xff] %v784
      %818 = vst [vmem:[%s816 + $0x10] sm:$0xff] %v785
      %819 = vst [vmem:[%s816 + $0x28] sm:$0xff] %v786
      %820 = vst [vmem:[%s816 + $0x30] sm:$0xff] %v787
      %821 = vst [vmem:[%s816 + $0x48] sm:$0xff] %v788
      %822 = vst [vmem:[%s816 + $0x50] sm:$0xff] %v789
      %823 = vst [vmem:[%s816 + $0x68] sm:$0xff] %v790
      %824 = vst [vmem:[%s816 + $0x70] sm:$0xff] %v791
      %825 = vst [vmem:[%s816 + $0x88] sm:$0xff] %v792
      %826 = vst [vmem:[%s816 + $0x90] sm:$0xff] %v793
      %827 = vst [vmem:[%s816 + $0xa8] sm:$0xff] %v794
      %828 = vst [vmem:[%s816 + $0xb0] sm:$0xff] %v795
      %829 = vst [vmem:[%s816 + $0xc8] sm:$0xff] %v796
      %830 = vst [vmem:[%s816 + $0xd0] sm:$0xff] %v797
      %831 = vst [vmem:[%s816 + $0xe8] sm:$0xff] %v798
      %832 = vst [vmem:[%s816 + $0xf0] sm:$0xff] %v799
      %833 = vst [vmem:[%s816 + $0x108] sm:$0xff] %v800
      %834 = vst [vmem:[%s816 + $0x110] sm:$0xff] %v801
      %835 = vst [vmem:[%s816 + $0x128] sm:$0xff] %v802
      %836 = vst [vmem:[%s816 + $0x130] sm:$0xff] %v803
      %837 = vst [vmem:[%s816 + $0x148] sm:$0xff] %v804
      %838 = vst [vmem:[%s816 + $0x150] sm:$0xff] %v805
      %839 = vst [vmem:[%s816 + $0x168] sm:$0xff] %v806
      %840 = vst [vmem:[%s816 + $0x170] sm:$0xff] %v807
      %841 = vst [vmem:[%s816 + $0x188] sm:$0xff] %v808
      %842 = vst [vmem:[%s816 + $0x190] sm:$0xff] %v809
      %843 = vst [vmem:[%s816 + $0x1a8] sm:$0xff] %v810
      %844 = vst [vmem:[%s816 + $0x1b0] sm:$0xff] %v811
      %845 = vst [vmem:[%s816 + $0x1c8] sm:$0xff] %v812
      %846 = vst [vmem:[%s816 + $0x1d0] sm:$0xff] %v813
      %847 = vst [vmem:[%s816 + $0x1e8] sm:$0xff] %v814
      %848 = vst [vmem:[%s816 + $0x1f0] sm:$0xff] %v815
      %v849 = vld [vmem:[%s2] sm:$0x7]
      %v850 = vld [vmem:[%s2 + $0x4] sm:$0x7]
      %v851 = vld [vmem:[%s2 + $0x8] sm:$0x7]
      loop: start=0, step=1, limit=16
      $region45: #{tpu_custom_call.1} parent=43 // loop_pre_header
        _
      $region46: #{tpu_custom_call.1} parent=43 // loop_header
        %s853 = sphi 0, %s857
        %p854 = scmp.ge.s32.totalorder %s853, 16
      $region47: #{tpu_custom_call.1} parent=43 // loop_header_branch
        %856 = sbr.rel (%p854) target = $region51
      $region48: #{tpu_custom_call.1} parent=43 // loop_body
        %s858 = smul.u32 %s853, 32
        %s859 = scalar_lea.vmem [#allocation2], %s858
        %v860 = vld [vmem:[%s859 + $0x7] sm:$0xff]
        %v861 = vld [vmem:[%s859 + $0xf] sm:$0xff]
        %v862 = vperm.slane %v849, 0
        %v863 = vmul.f32 %v860, %v862
        %v864 = vmul.f32 %v861, %v862
        %v865 = vadd.f32 %v863, 0.0
        %v866 = vadd.f32 %v864, 0.0
        %v867 = vld [vmem:[%s859 + $0x8] sm:$0xff]
        %v868 = vld [vmem:[%s859 + $0x10] sm:$0xff]
        %v869 = vperm.slane %v849, 1
        %v870 = vmul.f32 %v867, %v869
        %v871 = vmul.f32 %v868, %v869
        %v872 = vadd.f32 %v865, %v870
        %v873 = vadd.f32 %v866, %v871
        %v874 = vld [vmem:[%s859 + $0x9] sm:$0xff]
        %v875 = vld [vmem:[%s859 + $0x11] sm:$0xff]
        %v876 = vperm.slane %v849, 2
        %v877 = vmul.f32 %v874, %v876
        %v878 = vmul.f32 %v875, %v876
        %v879 = vadd.f32 %v872, %v877
        %v880 = vadd.f32 %v873, %v878
        %s881 = sadd.s32 %s853, 1
        %s882 = smul.u32 %s881, 32
        %s883 = scalar_lea.vmem [#allocation2], %s882
        %v884 = vld [vmem:[%s883 + $0x7] sm:$0xff]
        %v885 = vld [vmem:[%s883 + $0xf] sm:$0xff]
        %v886 = vperm.slane %v850, 0
        %v887 = vmul.f32 %v884, %v886
        %v888 = vmul.f32 %v885, %v886
        %v889 = vadd.f32 %v879, %v887
        %v890 = vadd.f32 %v880, %v888
        %v891 = vld [vmem:[%s883 + $0x8] sm:$0xff]
        %v892 = vld [vmem:[%s883 + $0x10] sm:$0xff]
        %v893 = vperm.slane %v850, 1
        %v894 = vmul.f32 %v891, %v893
        %v895 = vmul.f32 %v892, %v893
        %v896 = vadd.f32 %v889, %v894
        %v897 = vadd.f32 %v890, %v895
        %v898 = vld [vmem:[%s883 + $0x9] sm:$0xff]
        %v899 = vld [vmem:[%s883 + $0x11] sm:$0xff]
        %v900 = vperm.slane %v850, 2
        %v901 = vmul.f32 %v898, %v900
        %v902 = vmul.f32 %v899, %v900
        %v903 = vadd.f32 %v896, %v901
        %v904 = vadd.f32 %v897, %v902
        %s905 = sadd.s32 %s853, 2
        %s906 = smul.u32 %s905, 32
        %s907 = scalar_lea.vmem [#allocation2], %s906
        %v908 = vld [vmem:[%s907 + $0x7] sm:$0xff]
        %v909 = vld [vmem:[%s907 + $0xf] sm:$0xff]
        %v910 = vperm.slane %v851, 0
        %v911 = vmul.f32 %v908, %v910
        %v912 = vmul.f32 %v909, %v910
        %v913 = vadd.f32 %v903, %v911
        %v914 = vadd.f32 %v904, %v912
        %v915 = vld [vmem:[%s907 + $0x8] sm:$0xff]
        %v916 = vld [vmem:[%s907 + $0x10] sm:$0xff]
        %v917 = vperm.slane %v851, 1
        %v918 = vmul.f32 %v915, %v917
        %v919 = vmul.f32 %v916, %v917
        %v920 = vadd.f32 %v913, %v918
        %v921 = vadd.f32 %v914, %v919
        %v922 = vld [vmem:[%s907 + $0x9] sm:$0xff]
        %v923 = vld [vmem:[%s907 + $0x11] sm:$0xff]
        %v924 = vperm.slane %v851, 2
        %v925 = vmul.f32 %v922, %v924
        %v926 = vmul.f32 %v923, %v924
        %v927 = vadd.f32 %v920, %v925
        %v928 = vadd.f32 %v921, %v926
        %s929 = smul.u32 %s853, 16
        %s930 = scalar_lea.vmem [#allocation3], %s929
        %931 = vst [vmem:[%s930] sm:$0xff] %v927
        %932 = vst [vmem:[%s930 + $0x8] sm:$0xff] %v928
      $region49: #{tpu_custom_call.1} parent=43 // loop_footer
        %s857 = sadd.s32 1, %s853
      $region50: #{tpu_custom_call.1} parent=43 // loop_footer_branch
        %852 = sbr.rel target = $region46
      $region51: #{tpu_custom_call.1} parent=43 // loop_exit
        _
      %v933 = vld [vmem:[#allocation3] sm:$0xff]
      %v934 = vld [vmem:[#allocation3 + $0x8] sm:$0xff]
      %v935 = vld [vmem:[#allocation3 + $0x10] sm:$0xff]
      %v936 = vld [vmem:[#allocation3 + $0x18] sm:$0xff]
      %v937 = vld [vmem:[#allocation3 + $0x20] sm:$0xff]
      %v938 = vld [vmem:[#allocation3 + $0x28] sm:$0xff]
      %v939 = vld [vmem:[#allocation3 + $0x30] sm:$0xff]
      %v940 = vld [vmem:[#allocation3 + $0x38] sm:$0xff]
      %v941 = vld [vmem:[#allocation3 + $0x40] sm:$0xff]
      %v942 = vld [vmem:[#allocation3 + $0x48] sm:$0xff]
      %v943 = vld [vmem:[#allocation3 + $0x50] sm:$0xff]
      %v944 = vld [vmem:[#allocation3 + $0x58] sm:$0xff]
      %v945 = vld [vmem:[#allocation3 + $0x60] sm:$0xff]
      %v946 = vld [vmem:[#allocation3 + $0x68] sm:$0xff]
      %v947 = vld [vmem:[#allocation3 + $0x70] sm:$0xff]
      %v948 = vld [vmem:[#allocation3 + $0x78] sm:$0xff]
      %v949 = vld [vmem:[#allocation3 + $0x80] sm:$0xff]
      %v950 = vld [vmem:[#allocation3 + $0x88] sm:$0xff]
      %v951 = vld [vmem:[#allocation3 + $0x90] sm:$0xff]
      %v952 = vld [vmem:[#allocation3 + $0x98] sm:$0xff]
      %v953 = vld [vmem:[#allocation3 + $0xa0] sm:$0xff]
      %v954 = vld [vmem:[#allocation3 + $0xa8] sm:$0xff]
      %v955 = vld [vmem:[#allocation3 + $0xb0] sm:$0xff]
      %v956 = vld [vmem:[#allocation3 + $0xb8] sm:$0xff]
      %v957 = vld [vmem:[#allocation3 + $0xc0] sm:$0xff]
      %v958 = vld [vmem:[#allocation3 + $0xc8] sm:$0xff]
      %v959 = vld [vmem:[#allocation3 + $0xd0] sm:$0xff]
      %v960 = vld [vmem:[#allocation3 + $0xd8] sm:$0xff]
      %v961 = vld [vmem:[#allocation3 + $0xe0] sm:$0xff]
      %v962 = vld [vmem:[#allocation3 + $0xe8] sm:$0xff]
      %v963 = vld [vmem:[#allocation3 + $0xf0] sm:$0xff]
      %v964 = vld [vmem:[#allocation3 + $0xf8] sm:$0xff]
      %v965 = vperm.slane %v296, 0
      %v966 = vmul.f32 %v933, %v965
      %v967 = vmul.f32 %v934, %v965
      %v968 = vmul.f32 %v935, %v965
      %v969 = vmul.f32 %v936, %v965
      %v970 = vmul.f32 %v937, %v965
      %v971 = vmul.f32 %v938, %v965
      %v972 = vmul.f32 %v939, %v965
      %v973 = vmul.f32 %v940, %v965
      %v974 = vmul.f32 %v941, %v965
      %v975 = vmul.f32 %v942, %v965
      %v976 = vmul.f32 %v943, %v965
      %v977 = vmul.f32 %v944, %v965
      %v978 = vmul.f32 %v945, %v965
      %v979 = vmul.f32 %v946, %v965
      %v980 = vmul.f32 %v947, %v965
      %v981 = vmul.f32 %v948, %v965
      %v982 = vmul.f32 %v949, %v965
      %v983 = vmul.f32 %v950, %v965
      %v984 = vmul.f32 %v951, %v965
      %v985 = vmul.f32 %v952, %v965
      %v986 = vmul.f32 %v953, %v965
      %v987 = vmul.f32 %v954, %v965
      %v988 = vmul.f32 %v955, %v965
      %v989 = vmul.f32 %v956, %v965
      %v990 = vmul.f32 %v957, %v965
      %v991 = vmul.f32 %v958, %v965
      %v992 = vmul.f32 %v959, %v965
      %v993 = vmul.f32 %v960, %v965
      %v994 = vmul.f32 %v961, %v965
      %v995 = vmul.f32 %v962, %v965
      %v996 = vmul.f32 %v963, %v965
      %v997 = vmul.f32 %v964, %v965
      %v998 = vperm.slane %v297, 0
      %v999 = vadd.f32 %v966, %v998
      %v1000 = vadd.f32 %v967, %v998
      %v1001 = vadd.f32 %v968, %v998
      %v1002 = vadd.f32 %v969, %v998
      %v1003 = vadd.f32 %v970, %v998
      %v1004 = vadd.f32 %v971, %v998
      %v1005 = vadd.f32 %v972, %v998
      %v1006 = vadd.f32 %v973, %v998
      %v1007 = vadd.f32 %v974, %v998
      %v1008 = vadd.f32 %v975, %v998
      %v1009 = vadd.f32 %v976, %v998
      %v1010 = vadd.f32 %v977, %v998
      %v1011 = vadd.f32 %v978, %v998
      %v1012 = vadd.f32 %v979, %v998
      %v1013 = vadd.f32 %v980, %v998
      %v1014 = vadd.f32 %v981, %v998
      %v1015 = vadd.f32 %v982, %v998
      %v1016 = vadd.f32 %v983, %v998
      %v1017 = vadd.f32 %v984, %v998
      %v1018 = vadd.f32 %v985, %v998
      %v1019 = vadd.f32 %v986, %v998
      %v1020 = vadd.f32 %v987, %v998
      %v1021 = vadd.f32 %v988, %v998
      %v1022 = vadd.f32 %v989, %v998
      %v1023 = vadd.f32 %v990, %v998
      %v1024 = vadd.f32 %v991, %v998
      %v1025 = vadd.f32 %v992, %v998
      %v1026 = vadd.f32 %v993, %v998
      %v1027 = vadd.f32 %v994, %v998
      %v1028 = vadd.f32 %v995, %v998
      %v1029 = vadd.f32 %v996, %v998
      %v1030 = vadd.f32 %v997, %v998
      %v1031 = vmax.f32 %v999, 0.0
      %v1032 = vmax.f32 %v1000, 0.0
      %v1033 = vmax.f32 %v1001, 0.0
      %v1034 = vmax.f32 %v1002, 0.0
      %v1035 = vmax.f32 %v1003, 0.0
      %v1036 = vmax.f32 %v1004, 0.0
      %v1037 = vmax.f32 %v1005, 0.0
      %v1038 = vmax.f32 %v1006, 0.0
      %v1039 = vmax.f32 %v1007, 0.0
      %v1040 = vmax.f32 %v1008, 0.0
      %v1041 = vmax.f32 %v1009, 0.0
      %v1042 = vmax.f32 %v1010, 0.0
      %v1043 = vmax.f32 %v1011, 0.0
      %v1044 = vmax.f32 %v1012, 0.0
      %v1045 = vmax.f32 %v1013, 0.0
      %v1046 = vmax.f32 %v1014, 0.0
      %v1047 = vmax.f32 %v1015, 0.0
      %v1048 = vmax.f32 %v1016, 0.0
      %v1049 = vmax.f32 %v1017, 0.0
      %v1050 = vmax.f32 %v1018, 0.0
      %v1051 = vmax.f32 %v1019, 0.0
      %v1052 = vmax.f32 %v1020, 0.0
      %v1053 = vmax.f32 %v1021, 0.0
      %v1054 = vmax.f32 %v1022, 0.0
      %v1055 = vmax.f32 %v1023, 0.0
      %v1056 = vmax.f32 %v1024, 0.0
      %v1057 = vmax.f32 %v1025, 0.0
      %v1058 = vmax.f32 %v1026, 0.0
      %v1059 = vmax.f32 %v1027, 0.0
      %v1060 = vmax.f32 %v1028, 0.0
      %v1061 = vmax.f32 %v1029, 0.0
      %v1062 = vmax.f32 %v1030, 0.0
      %v1063 = vmin.f32 %v1031, 6.0
      %v1064 = vmin.f32 %v1032, 6.0
      %v1065 = vmin.f32 %v1033, 6.0
      %v1066 = vmin.f32 %v1034, 6.0
      %v1067 = vmin.f32 %v1035, 6.0
      %v1068 = vmin.f32 %v1036, 6.0
      %v1069 = vmin.f32 %v1037, 6.0
      %v1070 = vmin.f32 %v1038, 6.0
      %v1071 = vmin.f32 %v1039, 6.0
      %v1072 = vmin.f32 %v1040, 6.0
      %v1073 = vmin.f32 %v1041, 6.0
      %v1074 = vmin.f32 %v1042, 6.0
      %v1075 = vmin.f32 %v1043, 6.0
      %v1076 = vmin.f32 %v1044, 6.0
      %v1077 = vmin.f32 %v1045, 6.0
      %v1078 = vmin.f32 %v1046, 6.0
      %v1079 = vmin.f32 %v1047, 6.0
      %v1080 = vmin.f32 %v1048, 6.0
      %v1081 = vmin.f32 %v1049, 6.0
      %v1082 = vmin.f32 %v1050, 6.0
      %v1083 = vmin.f32 %v1051, 6.0
      %v1084 = vmin.f32 %v1052, 6.0
      %v1085 = vmin.f32 %v1053, 6.0
      %v1086 = vmin.f32 %v1054, 6.0
      %v1087 = vmin.f32 %v1055, 6.0
      %v1088 = vmin.f32 %v1056, 6.0
      %v1089 = vmin.f32 %v1057, 6.0
      %v1090 = vmin.f32 %v1058, 6.0
      %v1091 = vmin.f32 %v1059, 6.0
      %v1092 = vmin.f32 %v1060, 6.0
      %v1093 = vmin.f32 %v1061, 6.0
      %v1094 = vmin.f32 %v1062, 6.0
      %v1095 = vpack.c.bf16 %v1064, %v1063
      %v1096 = vpack.c.bf16 %v1066, %v1065
      %v1097 = vpack.c.bf16 %v1068, %v1067
      %v1098 = vpack.c.bf16 %v1070, %v1069
      %v1099 = vpack.c.bf16 %v1072, %v1071
      %v1100 = vpack.c.bf16 %v1074, %v1073
      %v1101 = vpack.c.bf16 %v1076, %v1075
      %v1102 = vpack.c.bf16 %v1078, %v1077
      %v1103 = vpack.c.bf16 %v1080, %v1079
      %v1104 = vpack.c.bf16 %v1082, %v1081
      %v1105 = vpack.c.bf16 %v1084, %v1083
      %v1106 = vpack.c.bf16 %v1086, %v1085
      %v1107 = vpack.c.bf16 %v1088, %v1087
      %v1108 = vpack.c.bf16 %v1090, %v1089
      %v1109 = vpack.c.bf16 %v1092, %v1091
      %v1110 = vpack.c.bf16 %v1094, %v1093
      %v1111 = vld [vmem:[%s3] sm:$0xf]
      %v1112 = vld [vmem:[%s3 + $0x4] sm:$0xf]
      %v1113 = vld [vmem:[%s3 + $0x8] sm:$0xf]
      %v1114 = vld [vmem:[%s3 + $0xc] sm:$0xf]
      %v1115 = vld [vmem:[%s3 + $0x10] sm:$0xf]
      %v1116 = vld [vmem:[%s3 + $0x14] sm:$0xf]
      %v1117 = vld [vmem:[%s3 + $0x18] sm:$0xf]
      %v1118 = vld [vmem:[%s3 + $0x1c] sm:$0xf]
      %v1119 = vld [vmem:[%s3 + $0x20] sm:$0xf]
      %v1120 = vld [vmem:[%s3 + $0x24] sm:$0xf]
      %v1121 = vld [vmem:[%s3 + $0x28] sm:$0xf]
      %v1122 = vld [vmem:[%s3 + $0x2c] sm:$0xf]
      %v1123 = vld [vmem:[%s3 + $0x30] sm:$0xf]
      %v1124 = vld [vmem:[%s3 + $0x34] sm:$0xf]
      %v1125 = vld [vmem:[%s3 + $0x38] sm:$0xf]
      %v1126 = vld [vmem:[%s3 + $0x3c] sm:$0xf]
      %v1143 = vunpack.c.l.b16 %v1111
      %v1144 = vunpack.c.l.b16 %v1112
      %v1145 = vunpack.c.l.b16 %v1113
      %v1146 = vunpack.c.l.b16 %v1114
      %v1147 = vunpack.c.l.b16 %v1115
      %v1148 = vunpack.c.l.b16 %v1116
      %v1149 = vunpack.c.l.b16 %v1117
      %v1150 = vunpack.c.l.b16 %v1118
      %v1151 = vunpack.c.l.b16 %v1119
      %v1152 = vunpack.c.l.b16 %v1120
      %v1153 = vunpack.c.l.b16 %v1121
      %v1154 = vunpack.c.l.b16 %v1122
      %v1155 = vunpack.c.l.b16 %v1123
      %v1156 = vunpack.c.l.b16 %v1124
      %v1157 = vunpack.c.l.b16 %v1125
      %v1158 = vunpack.c.l.b16 %v1126
      %v1159 = vpack.c.b16 %v1144, %v1143
      %v1160 = vpack.c.b16 %v1146, %v1145
      %v1161 = vpack.c.b16 %v1148, %v1147
      %v1162 = vpack.c.b16 %v1150, %v1149
      %v1163 = vpack.c.b16 %v1152, %v1151
      %v1164 = vpack.c.b16 %v1154, %v1153
      %v1165 = vpack.c.b16 %v1156, %v1155
      %v1166 = vpack.c.b16 %v1158, %v1157
      %1175 = vmatpush.bf16.msra.mxu0 %v1166
      %1176 = vmatpush.bf16.msra.mxu0 %v1165
      %1177 = vmatpush.bf16.msra.mxu0 %v1164
      %1178 = vmatpush.bf16.msra.mxu0 %v1163
      %1179 = vmatpush.bf16.msra.mxu0 %v1162
      %1180 = vmatpush.bf16.msra.mxu0 %v1161
      %1181 = vmatpush.bf16.msra.mxu0 %v1160
      %1182 = vmatpush.bf16.msra.mxu0 %v1159
      %1183 = vmatmul.bf16.gmra.mxu0 %v1095
      %v1184 = vpop.f32.mrf.mxu0
      %v1185 = vadd.f32 0.0, %v1184
      %v1186 = vpop.f32.mrf.mxu0
      %v1187 = vadd.f32 0.0, %v1186
      %1188 = vmatmul.bf16.gmra.mxu0 %v1096
      %v1189 = vpop.f32.mrf.mxu0
      %v1190 = vadd.f32 0.0, %v1189
      %v1191 = vpop.f32.mrf.mxu0
      %v1192 = vadd.f32 0.0, %v1191
      %1193 = vmatmul.bf16.gmra.mxu0 %v1097
      %v1194 = vpop.f32.mrf.mxu0
      %v1195 = vadd.f32 0.0, %v1194
      %v1196 = vpop.f32.mrf.mxu0
      %v1197 = vadd.f32 0.0, %v1196
      %1198 = vmatmul.bf16.gmra.mxu0 %v1098
      %v1199 = vpop.f32.mrf.mxu0
      %v1200 = vadd.f32 0.0, %v1199
      %v1201 = vpop.f32.mrf.mxu0
      %v1202 = vadd.f32 0.0, %v1201
      %1203 = vmatmul.bf16.gmra.mxu0 %v1099
      %v1204 = vpop.f32.mrf.mxu0
      %v1205 = vadd.f32 0.0, %v1204
      %v1206 = vpop.f32.mrf.mxu0
      %v1207 = vadd.f32 0.0, %v1206
      %1208 = vmatmul.bf16.gmra.mxu0 %v1100
      %v1209 = vpop.f32.mrf.mxu0
      %v1210 = vadd.f32 0.0, %v1209
      %v1211 = vpop.f32.mrf.mxu0
      %v1212 = vadd.f32 0.0, %v1211
      %1213 = vmatmul.bf16.gmra.mxu0 %v1101
      %v1214 = vpop.f32.mrf.mxu0
      %v1215 = vadd.f32 0.0, %v1214
      %v1216 = vpop.f32.mrf.mxu0
      %v1217 = vadd.f32 0.0, %v1216
      %1218 = vmatmul.bf16.gmra.mxu0 %v1102
      %v1219 = vpop.f32.mrf.mxu0
      %v1220 = vadd.f32 0.0, %v1219
      %v1221 = vpop.f32.mrf.mxu0
      %v1222 = vadd.f32 0.0, %v1221
      %1223 = vmatmul.bf16.gmra.mxu0 %v1103
      %v1224 = vpop.f32.mrf.mxu0
      %v1225 = vadd.f32 0.0, %v1224
      %v1226 = vpop.f32.mrf.mxu0
      %v1227 = vadd.f32 0.0, %v1226
      %1228 = vmatmul.bf16.gmra.mxu0 %v1104
      %v1229 = vpop.f32.mrf.mxu0
      %v1230 = vadd.f32 0.0, %v1229
      %v1231 = vpop.f32.mrf.mxu0
      %v1232 = vadd.f32 0.0, %v1231
      %1233 = vmatmul.bf16.gmra.mxu0 %v1105
      %v1234 = vpop.f32.mrf.mxu0
      %v1235 = vadd.f32 0.0, %v1234
      %v1236 = vpop.f32.mrf.mxu0
      %v1237 = vadd.f32 0.0, %v1236
      %1238 = vmatmul.bf16.gmra.mxu0 %v1106
      %v1239 = vpop.f32.mrf.mxu0
      %v1240 = vadd.f32 0.0, %v1239
      %v1241 = vpop.f32.mrf.mxu0
      %v1242 = vadd.f32 0.0, %v1241
      %1243 = vmatmul.bf16.gmra.mxu0 %v1107
      %v1244 = vpop.f32.mrf.mxu0
      %v1245 = vadd.f32 0.0, %v1244
      %v1246 = vpop.f32.mrf.mxu0
      %v1247 = vadd.f32 0.0, %v1246
      %1248 = vmatmul.bf16.gmra.mxu0 %v1108
      %v1249 = vpop.f32.mrf.mxu0
      %v1250 = vadd.f32 0.0, %v1249
      %v1251 = vpop.f32.mrf.mxu0
      %v1252 = vadd.f32 0.0, %v1251
      %1253 = vmatmul.bf16.gmra.mxu0 %v1109
      %v1254 = vpop.f32.mrf.mxu0
      %v1255 = vadd.f32 0.0, %v1254
      %v1256 = vpop.f32.mrf.mxu0
      %v1257 = vadd.f32 0.0, %v1256
      %1258 = vmatmul.bf16.gmra.mxu0 %v1110
      %v1259 = vpop.f32.mrf.mxu0
      %v1260 = vadd.f32 0.0, %v1259
      %v1261 = vpop.f32.mrf.mxu0
      %v1262 = vadd.f32 0.0, %v1261
      %1263 = vdwg.mxu0
      %v1264 = vperm.slane %v298, 0
      %v1265 = vmul.f32 %v1185, %v1264
      %v1266 = vmul.f32 %v1187, %v1264
      %v1267 = vmul.f32 %v1190, %v1264
      %v1268 = vmul.f32 %v1192, %v1264
      %v1269 = vmul.f32 %v1195, %v1264
      %v1270 = vmul.f32 %v1197, %v1264
      %v1271 = vmul.f32 %v1200, %v1264
      %v1272 = vmul.f32 %v1202, %v1264
      %v1273 = vmul.f32 %v1205, %v1264
      %v1274 = vmul.f32 %v1207, %v1264
      %v1275 = vmul.f32 %v1210, %v1264
      %v1276 = vmul.f32 %v1212, %v1264
      %v1277 = vmul.f32 %v1215, %v1264
      %v1278 = vmul.f32 %v1217, %v1264
      %v1279 = vmul.f32 %v1220, %v1264
      %v1280 = vmul.f32 %v1222, %v1264
      %v1281 = vmul.f32 %v1225, %v1264
      %v1282 = vmul.f32 %v1227, %v1264
      %v1283 = vmul.f32 %v1230, %v1264
      %v1284 = vmul.f32 %v1232, %v1264
      %v1285 = vmul.f32 %v1235, %v1264
      %v1286 = vmul.f32 %v1237, %v1264
      %v1287 = vmul.f32 %v1240, %v1264
      %v1288 = vmul.f32 %v1242, %v1264
      %v1289 = vmul.f32 %v1245, %v1264
      %v1290 = vmul.f32 %v1247, %v1264
      %v1291 = vmul.f32 %v1250, %v1264
      %v1292 = vmul.f32 %v1252, %v1264
      %v1293 = vmul.f32 %v1255, %v1264
      %v1294 = vmul.f32 %v1257, %v1264
      %v1295 = vmul.f32 %v1260, %v1264
      %v1296 = vmul.f32 %v1262, %v1264
      %v1297 = vperm.slane %v299, 0
      %v1298 = vadd.f32 %v1265, %v1297
      %v1299 = vadd.f32 %v1266, %v1297
      %v1300 = vadd.f32 %v1267, %v1297
      %v1301 = vadd.f32 %v1268, %v1297
      %v1302 = vadd.f32 %v1269, %v1297
      %v1303 = vadd.f32 %v1270, %v1297
      %v1304 = vadd.f32 %v1271, %v1297
      %v1305 = vadd.f32 %v1272, %v1297
      %v1306 = vadd.f32 %v1273, %v1297
      %v1307 = vadd.f32 %v1274, %v1297
      %v1308 = vadd.f32 %v1275, %v1297
      %v1309 = vadd.f32 %v1276, %v1297
      %v1310 = vadd.f32 %v1277, %v1297
      %v1311 = vadd.f32 %v1278, %v1297
      %v1312 = vadd.f32 %v1279, %v1297
      %v1313 = vadd.f32 %v1280, %v1297
      %v1314 = vadd.f32 %v1281, %v1297
      %v1315 = vadd.f32 %v1282, %v1297
      %v1316 = vadd.f32 %v1283, %v1297
      %v1317 = vadd.f32 %v1284, %v1297
      %v1318 = vadd.f32 %v1285, %v1297
      %v1319 = vadd.f32 %v1286, %v1297
      %v1320 = vadd.f32 %v1287, %v1297
      %v1321 = vadd.f32 %v1288, %v1297
      %v1322 = vadd.f32 %v1289, %v1297
      %v1323 = vadd.f32 %v1290, %v1297
      %v1324 = vadd.f32 %v1291, %v1297
      %v1325 = vadd.f32 %v1292, %v1297
      %v1326 = vadd.f32 %v1293, %v1297
      %v1327 = vadd.f32 %v1294, %v1297
      %v1328 = vadd.f32 %v1295, %v1297
      %v1329 = vadd.f32 %v1296, %v1297
      %v1330 = vld [vmem:[%s251] sm:$0xff]
      %v1331 = vld [vmem:[%s251 + $0x8] sm:$0xff]
      %v1332 = vld [vmem:[%s251 + $0x10] sm:$0xff]
      %v1333 = vld [vmem:[%s251 + $0x18] sm:$0xff]
      %v1334 = vld [vmem:[%s251 + $0x20] sm:$0xff]
      %v1335 = vld [vmem:[%s251 + $0x28] sm:$0xff]
      %v1336 = vld [vmem:[%s251 + $0x30] sm:$0xff]
      %v1337 = vld [vmem:[%s251 + $0x38] sm:$0xff]
      %v1338 = vld [vmem:[%s251 + $0x40] sm:$0xff]
      %v1339 = vld [vmem:[%s251 + $0x48] sm:$0xff]
      %v1340 = vld [vmem:[%s251 + $0x50] sm:$0xff]
      %v1341 = vld [vmem:[%s251 + $0x58] sm:$0xff]
      %v1342 = vld [vmem:[%s251 + $0x60] sm:$0xff]
      %v1343 = vld [vmem:[%s251 + $0x68] sm:$0xff]
      %v1344 = vld [vmem:[%s251 + $0x70] sm:$0xff]
      %v1345 = vld [vmem:[%s251 + $0x78] sm:$0xff]
      %v1346 = vld [vmem:[%s251 + $0x80] sm:$0xff]
      %v1347 = vld [vmem:[%s251 + $0x88] sm:$0xff]
      %v1348 = vld [vmem:[%s251 + $0x90] sm:$0xff]
      %v1349 = vld [vmem:[%s251 + $0x98] sm:$0xff]
      %v1350 = vld [vmem:[%s251 + $0xa0] sm:$0xff]
      %v1351 = vld [vmem:[%s251 + $0xa8] sm:$0xff]
      %v1352 = vld [vmem:[%s251 + $0xb0] sm:$0xff]
      %v1353 = vld [vmem:[%s251 + $0xb8] sm:$0xff]
      %v1354 = vld [vmem:[%s251 + $0xc0] sm:$0xff]
      %v1355 = vld [vmem:[%s251 + $0xc8] sm:$0xff]
      %v1356 = vld [vmem:[%s251 + $0xd0] sm:$0xff]
      %v1357 = vld [vmem:[%s251 + $0xd8] sm:$0xff]
      %v1358 = vld [vmem:[%s251 + $0xe0] sm:$0xff]
      %v1359 = vld [vmem:[%s251 + $0xe8] sm:$0xff]
      %v1360 = vld [vmem:[%s251 + $0xf0] sm:$0xff]
      %v1361 = vld [vmem:[%s251 + $0xf8] sm:$0xff]
      %v1362 = vadd.f32 %v1330, %v1298
      %v1363 = vadd.f32 %v1331, %v1299
      %v1364 = vadd.f32 %v1332, %v1300
      %v1365 = vadd.f32 %v1333, %v1301
      %v1366 = vadd.f32 %v1334, %v1302
      %v1367 = vadd.f32 %v1335, %v1303
      %v1368 = vadd.f32 %v1336, %v1304
      %v1369 = vadd.f32 %v1337, %v1305
      %v1370 = vadd.f32 %v1338, %v1306
      %v1371 = vadd.f32 %v1339, %v1307
      %v1372 = vadd.f32 %v1340, %v1308
      %v1373 = vadd.f32 %v1341, %v1309
      %v1374 = vadd.f32 %v1342, %v1310
      %v1375 = vadd.f32 %v1343, %v1311
      %v1376 = vadd.f32 %v1344, %v1312
      %v1377 = vadd.f32 %v1345, %v1313
      %v1378 = vadd.f32 %v1346, %v1314
      %v1379 = vadd.f32 %v1347, %v1315
      %v1380 = vadd.f32 %v1348, %v1316
      %v1381 = vadd.f32 %v1349, %v1317
      %v1382 = vadd.f32 %v1350, %v1318
      %v1383 = vadd.f32 %v1351, %v1319
      %v1384 = vadd.f32 %v1352, %v1320
      %v1385 = vadd.f32 %v1353, %v1321
      %v1386 = vadd.f32 %v1354, %v1322
      %v1387 = vadd.f32 %v1355, %v1323
      %v1388 = vadd.f32 %v1356, %v1324
      %v1389 = vadd.f32 %v1357, %v1325
      %v1390 = vadd.f32 %v1358, %v1326
      %v1391 = vadd.f32 %v1359, %v1327
      %v1392 = vadd.f32 %v1360, %v1328
      %v1393 = vadd.f32 %v1361, %v1329
      %1394 = vst.msk [vmem:[%s251] sm:$0xff] %vm653, %v1362
      %1395 = vst.msk [vmem:[%s251 + $0x8] sm:$0xff] %vm653, %v1363
      %1396 = vst.msk [vmem:[%s251 + $0x10] sm:$0xff] %vm653, %v1364
      %1397 = vst.msk [vmem:[%s251 + $0x18] sm:$0xff] %vm653, %v1365
      %1398 = vst.msk [vmem:[%s251 + $0x20] sm:$0xff] %vm653, %v1366
      %1399 = vst.msk [vmem:[%s251 + $0x28] sm:$0xff] %vm653, %v1367
      %1400 = vst.msk [vmem:[%s251 + $0x30] sm:$0xff] %vm653, %v1368
      %1401 = vst.msk [vmem:[%s251 + $0x38] sm:$0xff] %vm653, %v1369
      %1402 = vst.msk [vmem:[%s251 + $0x40] sm:$0xff] %vm653, %v1370
      %1403 = vst.msk [vmem:[%s251 + $0x48] sm:$0xff] %vm653, %v1371
      %1404 = vst.msk [vmem:[%s251 + $0x50] sm:$0xff] %vm653, %v1372
      %1405 = vst.msk [vmem:[%s251 + $0x58] sm:$0xff] %vm653, %v1373
      %1406 = vst.msk [vmem:[%s251 + $0x60] sm:$0xff] %vm653, %v1374
      %1407 = vst.msk [vmem:[%s251 + $0x68] sm:$0xff] %vm653, %v1375
      %1408 = vst.msk [vmem:[%s251 + $0x70] sm:$0xff] %vm653, %v1376
      %1409 = vst.msk [vmem:[%s251 + $0x78] sm:$0xff] %vm653, %v1377
      %1410 = vst.msk [vmem:[%s251 + $0x80] sm:$0xff] %vm653, %v1378
      %1411 = vst.msk [vmem:[%s251 + $0x88] sm:$0xff] %vm653, %v1379
      %1412 = vst.msk [vmem:[%s251 + $0x90] sm:$0xff] %vm653, %v1380
      %1413 = vst.msk [vmem:[%s251 + $0x98] sm:$0xff] %vm653, %v1381
      %1414 = vst.msk [vmem:[%s251 + $0xa0] sm:$0xff] %vm653, %v1382
      %1415 = vst.msk [vmem:[%s251 + $0xa8] sm:$0xff] %vm653, %v1383
      %1416 = vst.msk [vmem:[%s251 + $0xb0] sm:$0xff] %vm653, %v1384
      %1417 = vst.msk [vmem:[%s251 + $0xb8] sm:$0xff] %vm653, %v1385
      %1418 = vst.msk [vmem:[%s251 + $0xc0] sm:$0xff] %vm653, %v1386
      %1419 = vst.msk [vmem:[%s251 + $0xc8] sm:$0xff] %vm653, %v1387
      %1420 = vst.msk [vmem:[%s251 + $0xd0] sm:$0xff] %vm653, %v1388
      %1421 = vst.msk [vmem:[%s251 + $0xd8] sm:$0xff] %vm653, %v1389
      %1422 = vst.msk [vmem:[%s251 + $0xe0] sm:$0xff] %vm653, %v1390
      %1423 = vst.msk [vmem:[%s251 + $0xe8] sm:$0xff] %vm653, %v1391
      %1424 = vst.msk [vmem:[%s251 + $0xf0] sm:$0xff] %vm653, %v1392
      %1425 = vst.msk [vmem:[%s251 + $0xf8] sm:$0xff] %vm653, %v1393
      %p1426 = scmp.lt.s32.totalorder %s17, 1
      %s1427 = scalar_select %p1426, %s17, 1
      %s1428 = smul.addr %s1427, 32
      %s1429 = smul.addr %s1428, 8
      %s1430 = scalar_lea.vmem %s6, %s1429
      // Predicated region
      $region52: #{tpu_custom_call.1} parent=43 // pred_check
        %p1431 = pneg %p166
      $region53: #{tpu_custom_call.1} parent=43 // pred_check_branch
        %1433 = sbr.rel (%p1431) target = $region55
      $region54: #{tpu_custom_call.1} parent=43 // pred_region
        _
      $region55: #{tpu_custom_call.1} parent=43 // pred_fallthru
        _
    $region44: #{tpu_custom_call.1} parent=5 // pred_fallthru
      _
    %p1434 = scmp.le.s32.totalorder 2, %s12
    // Predicated region
    $region56: #{tpu_custom_call.1} parent=5 // pred_check
      %p1435 = pneg %p1434
    $region57: #{tpu_custom_call.1} parent=5 // pred_check_branch
      %1437 = sbr.rel (%p1435) target = $region59
    $region58: #{tpu_custom_call.1} parent=5 // pred_region
      %s1438 = ssub.s32 %s12, 2
      // Predicated region
      $region60: #{tpu_custom_call.1} parent=58 // pred_check
        %p1439 = pneg %p172
      $region61: #{tpu_custom_call.1} parent=58 // pred_check_branch
        %1441 = sbr.rel (%p1439) target = $region63
      $region62: #{tpu_custom_call.1} parent=58 // pred_region
        %p1442 = scmp.lt.s32.totalorder %s18, 1
        %s1443 = scalar_select %p1442, %s18, 1
        %s1444 = smul.addr %s1443, 32
        %s1445 = smul.addr %s1444, 8
        %s1446 = scalar_lea.vmem %s6, %s1445
      $region63: #{tpu_custom_call.1} parent=58 // pred_fallthru
        _
    $region59: #{tpu_custom_call.1} parent=5 // pred_fallthru
      _
  $region6: #{tpu_custom_call.1} parent=0 // loop_footer
    %s16 = sadd.s32 1, %s12
  $region7: #{tpu_custom_call.1} parent=0 // loop_footer_branch
    %11 = sbr.rel target = $region3
  $region8: #{tpu_custom_call.1} parent=0 // loop_exit
    _

</llo_original>
